<compile_context>
chip_gen: v6e
topology: v6e:2x2x1
jax: 0.10.0
libtpu: 0.0.40
codegen_flags: <defaults>
</compile_context>

<pallas_src>
import functools

import jax
import jax.numpy as jnp
from jax import lax
from jax.experimental import pallas as pl
from jax.experimental.pallas import tpu as pltpu


HIDDEN = 128      # nn.GRU(embedding_dim, 128)
Z_PAD = 1.0e4     # z-gate pre-activation for padded tail steps: sigmoid(Z_PAD) == 1.0


def gru_recurrent_kernel(gates_ref, whh_ref, bhn_ref, h_ref, *, time_chunk, unroll):
    """One grid step == `time_chunk` GRU time steps for one batch block.

    gates_ref : (Tc, Bt, 3H)       precomputed  x_t @ W_ih^T + b_ih + [b_hr, b_hz, 0]
                                   (padded tail steps carry Z_PAD in the z slice)
    whh_ref   : (H, 3H)  bf16      hidden-to-hidden weights (transposed), grid-invariant
    bhn_ref   : (1, H)   f32       n-gate hidden bias b_hn
    h_ref     : (Bt, H)  f32       output block; its index_map is constant along the
                                   time-chunk axis so it stays VMEM-resident and doubles
                                   as the recurrent-state accumulator (no scratch).
    """
    c = pl.program_id(1)
    H = HIDDEN

    @pl.when(c == 0)
    def _():
        h_ref[...] = jnp.zeros_like(h_ref)

    # Loaded once per chunk and kept live across the (partially) unrolled loop.
    # Explicit MXU weight staging (pltpu.matmul_push_rhs / matmul_acc_lhs / matmul_pop)
    # would pin the RHS in the systolic array for all Tc steps; relying on Mosaic's
    # hoisting of the resident weight vregs here.
    whh = whh_ref[...]                       # (H, 3H) bf16
    bhn = bhn_ref[...]                       # (1, H)  f32

    def step(i, h):
        gi = gates_ref[i].astype(jnp.float32)                       # (Bt, 3H)
        gh = jnp.dot(h.astype(whh.dtype), whh,
                     preferred_element_type=jnp.float32)            # (Bt, 3H) f32 acc
        r = jax.nn.sigmoid(gi[:, 0:H] + gh[:, 0:H])
        z = jax.nn.sigmoid(gi[:, H:2 * H] + gh[:, H:2 * H])
        n = jnp.tanh(gi[:, 2 * H:] + r * (gh[:, 2 * H:] + bhn))
        return n + z * (h - n)               # == (1 - z) * n + z * h

    h_ref[...] = lax.fori_loop(0, time_chunk, step, h_ref[...], unroll=unroll)


def rnn_encoder_forward(token_ids, embedding_matrix, w_ih, w_hh, b_ih, b_hh,
                        *, time_chunk=64, unroll=8, gates_dtype=jnp.float32):
    """token_ids: (B, T) int32. Returns the final GRU hidden state (B, HIDDEN) in f32."""
    B, T = token_ids.shape
    H = HIDDEN
    if T == 0:  # empty sequence: torch GRU returns the zero initial hidden state
        return jnp.zeros((B, H), jnp.float32)

    # 1) Fused frozen gate table: (VOCAB, 3H) = emb @ W_ih^T + b_ih + [b_hr, b_hz, 0].
    #    (b_hn must stay inside r * (W_hn h + b_hn), so it is NOT folded here.)
    bias_fold = b_ih + jnp.concatenate([b_hh[:2 * H], jnp.zeros((H,), b_hh.dtype)])
    gate_table = (embedding_matrix.astype(jnp.float32)
                  @ w_ih.T.astype(jnp.float32) + bias_fold)          # (VOCAB, 3H)

    # 2) One lane-dense gather, directly in (T, B, 3H) order.
    gates = jnp.take(gate_table, token_ids.T, axis=0)                # (T, B, 3H) f32

    # 3) Batch padding / blocking.  For B_pad >= 16 use >= 2 batch blocks so the
    #    "parallel" grid axis can be split across v7x's two TensorCores.
    B_pad = max(8, -(-B // 8) * 8)
    if B_pad > 8:
        half = -(-B_pad // 2)
        Bt = min(128, -(-half // 8) * 8)
        B_pad = -(-B_pad // Bt) * Bt
    else:
        Bt = B_pad
    num_b_blocks = B_pad // Bt

    # 4) Time chunking, capped by a per-pipeline-buffer VMEM budget (double-buffered;
    #    v7x only has 64 MiB of VMEM).
    itemsize = jnp.dtype(gates_dtype).itemsize
    per_step_bytes = Bt * 3 * H * itemsize
    vmem_gates_budget = 12 * 1024 * 1024
    tc_cap = max(1, vmem_gates_budget // per_step_bytes)
    Tc = int(max(1, min(time_chunk, T, tc_cap)))
    num_chunks = -(-T // Tc)
    T_pad = num_chunks * Tc

    # 5) Pad batch with zero gates; pad tail time steps so that z == 1 (h carried
    #    through unchanged) -> no per-step mask inside the kernel.
    gates = jnp.pad(gates, ((0, 0), (0, B_pad - B), (0, 0)))
    if T_pad != T:
        pad_row = jnp.concatenate([jnp.zeros((H,), jnp.float32),
                                   jnp.full((H,), Z_PAD, jnp.float32),
                                   jnp.zeros((H,), jnp.float32)])
        gates = jnp.concatenate(
            [gates, jnp.broadcast_to(pad_row, (T_pad - T, B_pad, 3 * H))], axis=0)
    gates = gates.astype(gates_dtype)

    # 6) Recurrent-only weights: bf16 W_hh^T (f32 MXU accumulation) + n-gate bias only.
    whh_t = w_hh.T.astype(jnp.bfloat16)                               # (H, 3H)
    bhn = b_hh[2 * H:].astype(jnp.float32).reshape(1, H)              # (1, H)

    gates_block_bytes = Tc * per_step_bytes
    vmem_limit = int(min(48 << 20, max(24 << 20, 2 * gates_block_bytes + (8 << 20))))

    kernel = functools.partial(gru_recurrent_kernel,
                               time_chunk=Tc, unroll=int(min(unroll, Tc)))

    h_pad = pl.pallas_call(
        kernel,
        out_shape=jax.ShapeDtypeStruct((B_pad, H), jnp.float32),
        grid_spec=pltpu.PrefetchScalarGridSpec(
            num_scalar_prefetch=0,
            grid=(num_b_blocks, num_chunks),
            in_specs=[
                pl.BlockSpec((Tc, Bt, 3 * H), lambda b, c: (c, b, 0)),  # gate chunk
                pl.BlockSpec((H, 3 * H), lambda b, c: (0, 0)),          # W_hh^T (resident)
                pl.BlockSpec((1, H), lambda b, c: (0, 0)),              # b_hn
            ],
            out_specs=pl.BlockSpec((Bt, H), lambda b, c: (b, 0)),       # state accumulator
        ),
        compiler_params=pltpu.CompilerParams(
            dimension_semantics=("parallel", "arbitrary"),   # batch ∥, time sequential
            vmem_limit_bytes=vmem_limit,
        ),
    )(gates, whh_t, bhn)

    return h_pad[:B]


def rnn_encoder_reference(token_ids, embedding_matrix, w_ih, w_hh, b_ih, b_hh):
    """Pure-JAX f32 reference matching torch.nn.GRU semantics (gate order r,z,n)."""
    B, T = token_ids.shape
    H = HIDDEN
    embedded = embedding_matrix[token_ids]                 # (B, T, E)
    x_tbe = jnp.transpose(embedded, (1, 0, 2))             # (T, B, E)

    def step(h, x_t):
        gi = x_t @ w_ih.T + b_ih
        gh = h @ w_hh.T + b_hh
        i_r, i_z, i_n = gi[:, :H], gi[:, H:2 * H], gi[:, 2 * H:]
        h_r, h_z, h_n = gh[:, :H], gh[:, H:2 * H], gh[:, 2 * H:]
        r = jax.nn.sigmoid(i_r + h_r)
        z = jax.nn.sigmoid(i_z + h_z)
        n = jnp.tanh(i_n + r * h_n)
        return (1.0 - z) * n + z * h, None

    h0 = jnp.zeros((B, H), jnp.float32)
    h_final, _ = lax.scan(step, h0, x_tbe)
    return h_final


def _pick_gates_dtype():
    """bf16 gate streaming on v6e/v7x (per perf review); keep f32 on v5e and older."""
    try:
        kind = jax.devices()[0].device_kind.lower()
    except Exception:
        return jnp.float32
    if "v6" in kind or "v7" in kind:
        return jnp.bfloat16
    return jnp.float32


if __name__ == "__main__":
    VOCAB, EMB_DIM = 50, 32
    key = jax.random.PRNGKey(0)
    k_emb, k_ids, k_wih, k_whh, k_bih, k_bhh, k_ids2 = jax.random.split(key, 7)

    embedding_matrix = jax.random.normal(k_emb, (VOCAB, EMB_DIM), jnp.float32) * 0.1
    # torch.nn.GRU(EMB_DIM, 128) parameter shapes: (3H, E), (3H, H), (3H,), (3H,)
    w_ih = jax.random.normal(k_wih, (3 * HIDDEN, EMB_DIM), jnp.float32) * 0.05
    w_hh = jax.random.normal(k_whh, (3 * HIDDEN, HIDDEN), jnp.float32) * 0.05
    b_ih = jax.random.normal(k_bih, (3 * HIDDEN,), jnp.float32) * 0.05
    b_hh = jax.random.normal(k_bhh, (3 * HIDDEN,), jnp.float32) * 0.05

    gates_dtype = _pick_gates_dtype()
    # bf16 gate streaming + bf16 W_hh => relaxed tolerance vs the f32 reference.
    tol = 1e-2 if jnp.dtype(gates_dtype) == jnp.dtype(jnp.bfloat16) else 5e-3

    # Case 1: small shapes consistent with the module (batch=2, seq=8).
    token_ids = jax.random.randint(k_ids, (2, 8), 0, VOCAB, dtype=jnp.int32)
    out = jax.block_until_ready(
        rnn_encoder_forward(token_ids, embedding_matrix, w_ih, w_hh, b_ih, b_hh,
                            gates_dtype=gates_dtype))
    ref = rnn_encoder_reference(token_ids, embedding_matrix, w_ih, w_hh, b_ih, b_hh)
    assert out.shape == (2, HIDDEN)
    assert float(jnp.max(jnp.abs(out - ref))) < tol

    # Case 2: exercises batch padding (B=3 -> 8 sublanes), multi-chunk time
    # (T=50 -> 2x32) and the z-gate tail-padding path (T_pad=64 != 50).
    token_ids2 = jax.random.randint(k_ids2, (3, 50), 0, VOCAB, dtype=jnp.int32)
    out2 = jax.block_until_ready(
        rnn_encoder_forward(token_ids2, embedding_matrix, w_ih, w_hh, b_ih, b_hh,
                            time_chunk=32, gates_dtype=gates_dtype))
    ref2 = rnn_encoder_reference(token_ids2, embedding_matrix, w_ih, w_hh, b_ih, b_hh)
    assert out2.shape == (3, HIDDEN)
    assert float(jnp.max(jnp.abs(out2 - ref2))) < tol

    print("KERNEL_OK")
</pallas_src>

<mosaic_0001>
module attributes {stable_mosaic.version = 11 : i64} {
  func.func @gru_recurrent_kernel(%arg0: i32, %arg1: i32, %arg2: memref<8x8x384xf32, #tpu.memory_space<vmem>>, %arg3: memref<128x384xbf16, #tpu.memory_space<vmem>>, %arg4: memref<1x128xf32, #tpu.memory_space<vmem>>, %arg5: memref<8x128xf32, #tpu.memory_space<vmem>>) attributes {dimension_semantics = [#tpu.dimension_semantics<parallel>, #tpu.dimension_semantics<arbitrary>], iteration_bounds = array<i64: 1, 1>, scalar_prefetch = 0 : i64, scratch_operands = 0 : i64, tpu.core_type = #tpu.core_type<tc>, window_params = [{transform_indices = @transform_0, window_bounds = array<i64: 8, 8, 384>}, {pipeline_mode = #tpu.pipeline_mode<synchronous>, transform_indices = @transform_1, window_bounds = array<i64: 128, 384>}, {pipeline_mode = #tpu.pipeline_mode<synchronous>, transform_indices = @transform_2, window_bounds = array<i64: 1, 128>}, {transform_indices = @transform_3, window_bounds = array<i64: 8, 128>}]} {
    %c0_i32 = arith.constant 0 : i32
    %0 = arith.cmpi eq, %arg1, %c0_i32 : i32
    %1 = arith.extui %0 : i1 to i32
    %c0_i32_0 = arith.constant 0 : i32
    %2 = arith.cmpi ne, %1, %c0_i32_0 : i32
    scf.if %2 {
      %cst_48 = arith.constant 0.000000e+00 : f32
      %255 = vector.broadcast %cst_48 : f32 to vector<8x128xf32>
      %c0_49 = arith.constant 0 : index
      %c0_50 = arith.constant 0 : index
      %256 = vector.load %arg5[%c0_49, %c0_50] : memref<8x128xf32, #tpu.memory_space<vmem>>, vector<8x128xf32>
      tpu.vector_store %arg5[%c0_49, %c0_50], %255 {strides = array<i32>} : memref<8x128xf32, #tpu.memory_space<vmem>>, vector<8x128xf32>,
    } else {
    }
    %c0 = arith.constant 0 : index
    %c0_1 = arith.constant 0 : index
    %3 = vector.load %arg3[%c0, %c0_1] : memref<128x384xbf16, #tpu.memory_space<vmem>>, vector<128x384xbf16>
    %c0_2 = arith.constant 0 : index
    %c0_3 = arith.constant 0 : index
    %4 = vector.load %arg4[%c0_2, %c0_3] : memref<1x128xf32, #tpu.memory_space<vmem>>, vector<1x128xf32>
    %c0_4 = arith.constant 0 : index
    %c0_5 = arith.constant 0 : index
    %5 = vector.load %arg5[%c0_4, %c0_5] : memref<8x128xf32, #tpu.memory_space<vmem>>, vector<8x128xf32>
    %c0_i32_6 = arith.constant 0 : i32
    %6 = arith.index_cast %c0_i32_6 : i32 to index
    %c0_7 = arith.constant 0 : index
    %c0_8 = arith.constant 0 : index
    %7 = vector.load %arg2[%6, %c0_7, %c0_8] : memref<8x8x384xf32, #tpu.memory_space<vmem>>, vector<1x8x384xf32>
    %8 = vector.shape_cast %7 : vector<1x8x384xf32> to vector<8x384xf32>
    %9 = arith.truncf %5 : vector<8x128xf32> to vector<8x128xbf16>
    %cst = arith.constant dense<0.000000e+00> : vector<8x384xf32>
    %10 = tpu.matmul %9, %3, %cst {dimension_numbers = #tpu.dot_dimension_numbers<[1], [0], [0], [1], [0, 0, 1, 1], [], []>} : vector<8x128xbf16>, vector<128x384xbf16>, vector<8x384xf32> -> vector<8x384xf32>
    %11 = vector.extract_strided_slice %8 {offsets = [0, 0], sizes = [8, 128], strides = [1, 1]} : vector<8x384xf32> to vector<8x128xf32>
    %12 = vector.extract_strided_slice %10 {offsets = [0, 0], sizes = [8, 128], strides = [1, 1]} : vector<8x384xf32> to vector<8x128xf32>
    %13 = arith.addf %11, %12 : vector<8x128xf32>
    %14 = arith.negf %13 : vector<8x128xf32>
    %15 = math.exp %14 : vector<8x128xf32>
    %cst_9 = arith.constant 1.000000e+00 : f32
    %16 = vector.broadcast %cst_9 : f32 to vector<8x128xf32>
    %17 = arith.addf %16, %15 : vector<8x128xf32>
    %18 = arith.divf %16, %17 : vector<8x128xf32>
    %19 = vector.extract_strided_slice %8 {offsets = [0, 128], sizes = [8, 128], strides = [1, 1]} : vector<8x384xf32> to vector<8x128xf32>
    %20 = vector.extract_strided_slice %10 {offsets = [0, 128], sizes = [8, 128], strides = [1, 1]} : vector<8x384xf32> to vector<8x128xf32>
    %21 = arith.addf %19, %20 : vector<8x128xf32>
    %22 = arith.negf %21 : vector<8x128xf32>
    %23 = math.exp %22 : vector<8x128xf32>
    %cst_10 = arith.constant 1.000000e+00 : f32
    %24 = vector.broadcast %cst_10 : f32 to vector<8x128xf32>
    %25 = arith.addf %24, %23 : vector<8x128xf32>
    %26 = arith.divf %24, %25 : vector<8x128xf32>
    %27 = vector.extract_strided_slice %8 {offsets = [0, 256], sizes = [8, 128], strides = [1, 1]} : vector<8x384xf32> to vector<8x128xf32>
    %28 = vector.extract_strided_slice %10 {offsets = [0, 256], sizes = [8, 128], strides = [1, 1]} : vector<8x384xf32> to vector<8x128xf32>
    %29 = vector.broadcast %4 : vector<1x128xf32> to vector<8x128xf32>
    %30 = arith.addf %28, %29 : vector<8x128xf32>
    %31 = arith.mulf %18, %30 : vector<8x128xf32>
    %32 = arith.addf %27, %31 : vector<8x128xf32>
    %33 = math.tanh %32 : vector<8x128xf32>
    %34 = arith.subf %5, %33 : vector<8x128xf32>
    %35 = arith.mulf %26, %34 : vector<8x128xf32>
    %36 = arith.addf %33, %35 : vector<8x128xf32>
    %c1_i32 = arith.constant 1 : i32
    %37 = arith.index_cast %c1_i32 : i32 to index
    %c0_11 = arith.constant 0 : index
    %c0_12 = arith.constant 0 : index
    %38 = vector.load %arg2[%37, %c0_11, %c0_12] : memref<8x8x384xf32, #tpu.memory_space<vmem>>, vector<1x8x384xf32>
    %39 = vector.shape_cast %38 : vector<1x8x384xf32> to vector<8x384xf32>
    %40 = arith.truncf %36 : vector<8x128xf32> to vector<8x128xbf16>
    %cst_13 = arith.constant dense<0.000000e+00> : vector<8x384xf32>
    %41 = tpu.matmul %40, %3, %cst_13 {dimension_numbers = #tpu.dot_dimension_numbers<[1], [0], [0], [1], [0, 0, 1, 1], [], []>} : vector<8x128xbf16>, vector<128x384xbf16>, vector<8x384xf32> -> vector<8x384xf32>
    %42 = vector.extract_strided_slice %39 {offsets = [0, 0], sizes = [8, 128], strides = [1, 1]} : vector<8x384xf32> to vector<8x128xf32>
    %43 = vector.extract_strided_slice %41 {offsets = [0, 0], sizes = [8, 128], strides = [1, 1]} : vector<8x384xf32> to vector<8x128xf32>
    %44 = arith.addf %42, %43 : vector<8x128xf32>
    %45 = arith.negf %44 : vector<8x128xf32>
    %46 = math.exp %45 : vector<8x128xf32>
    %cst_14 = arith.constant 1.000000e+00 : f32
    %47 = vector.broadcast %cst_14 : f32 to vector<8x128xf32>
    %48 = arith.addf %47, %46 : vector<8x128xf32>
    %49 = arith.divf %47, %48 : vector<8x128xf32>
    %50 = vector.extract_strided_slice %39 {offsets = [0, 128], sizes = [8, 128], strides = [1, 1]} : vector<8x384xf32> to vector<8x128xf32>
    %51 = vector.extract_strided_slice %41 {offsets = [0, 128], sizes = [8, 128], strides = [1, 1]} : vector<8x384xf32> to vector<8x128xf32>
    %52 = arith.addf %50, %51 : vector<8x128xf32>
    %53 = arith.negf %52 : vector<8x128xf32>
    %54 = math.exp %53 : vector<8x128xf32>
    %cst_15 = arith.constant 1.000000e+00 : f32
    %55 = vector.broadcast %cst_15 : f32 to vector<8x128xf32>
    %56 = arith.addf %55, %54 : vector<8x128xf32>
    %57 = arith.divf %55, %56 : vector<8x128xf32>
    %58 = vector.extract_strided_slice %39 {offsets = [0, 256], sizes = [8, 128], strides = [1, 1]} : vector<8x384xf32> to vector<8x128xf32>
    %59 = vector.extract_strided_slice %41 {offsets = [0, 256], sizes = [8, 128], strides = [1, 1]} : vector<8x384xf32> to vector<8x128xf32>
    %60 = vector.broadcast %4 : vector<1x128xf32> to vector<8x128xf32>
    %61 = arith.addf %59, %60 : vector<8x128xf32>
    %62 = arith.mulf %49, %61 : vector<8x128xf32>
    %63 = arith.addf %58, %62 : vector<8x128xf32>
    %64 = math.tanh %63 : vector<8x128xf32>
    %65 = arith.subf %36, %64 : vector<8x128xf32>
    %66 = arith.mulf %57, %65 : vector<8x128xf32>
    %67 = arith.addf %64, %66 : vector<8x128xf32>
    %c2_i32 = arith.constant 2 : i32
    %68 = arith.index_cast %c2_i32 : i32 to index
    %c0_16 = arith.constant 0 : index
    %c0_17 = arith.constant 0 : index
    %69 = vector.load %arg2[%68, %c0_16, %c0_17] : memref<8x8x384xf32, #tpu.memory_space<vmem>>, vector<1x8x384xf32>
    %70 = vector.shape_cast %69 : vector<1x8x384xf32> to vector<8x384xf32>
    %71 = arith.truncf %67 : vector<8x128xf32> to vector<8x128xbf16>
    %cst_18 = arith.constant dense<0.000000e+00> : vector<8x384xf32>
    %72 = tpu.matmul %71, %3, %cst_18 {dimension_numbers = #tpu.dot_dimension_numbers<[1], [0], [0], [1], [0, 0, 1, 1], [], []>} : vector<8x128xbf16>, vector<128x384xbf16>, vector<8x384xf32> -> vector<8x384xf32>
    %73 = vector.extract_strided_slice %70 {offsets = [0, 0], sizes = [8, 128], strides = [1, 1]} : vector<8x384xf32> to vector<8x128xf32>
    %74 = vector.extract_strided_slice %72 {offsets = [0, 0], sizes = [8, 128], strides = [1, 1]} : vector<8x384xf32> to vector<8x128xf32>
    %75 = arith.addf %73, %74 : vector<8x128xf32>
    %76 = arith.negf %75 : vector<8x128xf32>
    %77 = math.exp %76 : vector<8x128xf32>
    %cst_19 = arith.constant 1.000000e+00 : f32
    %78 = vector.broadcast %cst_19 : f32 to vector<8x128xf32>
    %79 = arith.addf %78, %77 : vector<8x128xf32>
    %80 = arith.divf %78, %79 : vector<8x128xf32>
    %81 = vector.extract_strided_slice %70 {offsets = [0, 128], sizes = [8, 128], strides = [1, 1]} : vector<8x384xf32> to vector<8x128xf32>
    %82 = vector.extract_strided_slice %72 {offsets = [0, 128], sizes = [8, 128], strides = [1, 1]} : vector<8x384xf32> to vector<8x128xf32>
    %83 = arith.addf %81, %82 : vector<8x128xf32>
    %84 = arith.negf %83 : vector<8x128xf32>
    %85 = math.exp %84 : vector<8x128xf32>
    %cst_20 = arith.constant 1.000000e+00 : f32
    %86 = vector.broadcast %cst_20 : f32 to vector<8x128xf32>
    %87 = arith.addf %86, %85 : vector<8x128xf32>
    %88 = arith.divf %86, %87 : vector<8x128xf32>
    %89 = vector.extract_strided_slice %70 {offsets = [0, 256], sizes = [8, 128], strides = [1, 1]} : vector<8x384xf32> to vector<8x128xf32>
    %90 = vector.extract_strided_slice %72 {offsets = [0, 256], sizes = [8, 128], strides = [1, 1]} : vector<8x384xf32> to vector<8x128xf32>
    %91 = vector.broadcast %4 : vector<1x128xf32> to vector<8x128xf32>
    %92 = arith.addf %90, %91 : vector<8x128xf32>
    %93 = arith.mulf %80, %92 : vector<8x128xf32>
    %94 = arith.addf %89, %93 : vector<8x128xf32>
    %95 = math.tanh %94 : vector<8x128xf32>
    %96 = arith.subf %67, %95 : vector<8x128xf32>
    %97 = arith.mulf %88, %96 : vector<8x128xf32>
    %98 = arith.addf %95, %97 : vector<8x128xf32>
    %c3_i32 = arith.constant 3 : i32
    %99 = arith.index_cast %c3_i32 : i32 to index
    %c0_21 = arith.constant 0 : index
    %c0_22 = arith.constant 0 : index
    %100 = vector.load %arg2[%99, %c0_21, %c0_22] : memref<8x8x384xf32, #tpu.memory_space<vmem>>, vector<1x8x384xf32>
    %101 = vector.shape_cast %100 : vector<1x8x384xf32> to vector<8x384xf32>
    %102 = arith.truncf %98 : vector<8x128xf32> to vector<8x128xbf16>
    %cst_23 = arith.constant dense<0.000000e+00> : vector<8x384xf32>
    %103 = tpu.matmul %102, %3, %cst_23 {dimension_numbers = #tpu.dot_dimension_numbers<[1], [0], [0], [1], [0, 0, 1, 1], [], []>} : vector<8x128xbf16>, vector<128x384xbf16>, vector<8x384xf32> -> vector<8x384xf32>
    %104 = vector.extract_strided_slice %101 {offsets = [0, 0], sizes = [8, 128], strides = [1, 1]} : vector<8x384xf32> to vector<8x128xf32>
    %105 = vector.extract_strided_slice %103 {offsets = [0, 0], sizes = [8, 128], strides = [1, 1]} : vector<8x384xf32> to vector<8x128xf32>
    %106 = arith.addf %104, %105 : vector<8x128xf32>
    %107 = arith.negf %106 : vector<8x128xf32>
    %108 = math.exp %107 : vector<8x128xf32>
    %cst_24 = arith.constant 1.000000e+00 : f32
    %109 = vector.broadcast %cst_24 : f32 to vector<8x128xf32>
    %110 = arith.addf %109, %108 : vector<8x128xf32>
    %111 = arith.divf %109, %110 : vector<8x128xf32>
    %112 = vector.extract_strided_slice %101 {offsets = [0, 128], sizes = [8, 128], strides = [1, 1]} : vector<8x384xf32> to vector<8x128xf32>
    %113 = vector.extract_strided_slice %103 {offsets = [0, 128], sizes = [8, 128], strides = [1, 1]} : vector<8x384xf32> to vector<8x128xf32>
    %114 = arith.addf %112, %113 : vector<8x128xf32>
    %115 = arith.negf %114 : vector<8x128xf32>
    %116 = math.exp %115 : vector<8x128xf32>
    %cst_25 = arith.constant 1.000000e+00 : f32
    %117 = vector.broadcast %cst_25 : f32 to vector<8x128xf32>
    %118 = arith.addf %117, %116 : vector<8x128xf32>
    %119 = arith.divf %117, %118 : vector<8x128xf32>
    %120 = vector.extract_strided_slice %101 {offsets = [0, 256], sizes = [8, 128], strides = [1, 1]} : vector<8x384xf32> to vector<8x128xf32>
    %121 = vector.extract_strided_slice %103 {offsets = [0, 256], sizes = [8, 128], strides = [1, 1]} : vector<8x384xf32> to vector<8x128xf32>
    %122 = vector.broadcast %4 : vector<1x128xf32> to vector<8x128xf32>
    %123 = arith.addf %121, %122 : vector<8x128xf32>
    %124 = arith.mulf %111, %123 : vector<8x128xf32>
    %125 = arith.addf %120, %124 : vector<8x128xf32>
    %126 = math.tanh %125 : vector<8x128xf32>
    %127 = arith.subf %98, %126 : vector<8x128xf32>
    %128 = arith.mulf %119, %127 : vector<8x128xf32>
    %129 = arith.addf %126, %128 : vector<8x128xf32>
    %c4_i32 = arith.constant 4 : i32
    %130 = arith.index_cast %c4_i32 : i32 to index
    %c0_26 = arith.constant 0 : index
    %c0_27 = arith.constant 0 : index
    %131 = vector.load %arg2[%130, %c0_26, %c0_27] : memref<8x8x384xf32, #tpu.memory_space<vmem>>, vector<1x8x384xf32>
    %132 = vector.shape_cast %131 : vector<1x8x384xf32> to vector<8x384xf32>
    %133 = arith.truncf %129 : vector<8x128xf32> to vector<8x128xbf16>
    %cst_28 = arith.constant dense<0.000000e+00> : vector<8x384xf32>
    %134 = tpu.matmul %133, %3, %cst_28 {dimension_numbers = #tpu.dot_dimension_numbers<[1], [0], [0], [1], [0, 0, 1, 1], [], []>} : vector<8x128xbf16>, vector<128x384xbf16>, vector<8x384xf32> -> vector<8x384xf32>
    %135 = vector.extract_strided_slice %132 {offsets = [0, 0], sizes = [8, 128], strides = [1, 1]} : vector<8x384xf32> to vector<8x128xf32>
    %136 = vector.extract_strided_slice %134 {offsets = [0, 0], sizes = [8, 128], strides = [1, 1]} : vector<8x384xf32> to vector<8x128xf32>
    %137 = arith.addf %135, %136 : vector<8x128xf32>
    %138 = arith.negf %137 : vector<8x128xf32>
    %139 = math.exp %138 : vector<8x128xf32>
    %cst_29 = arith.constant 1.000000e+00 : f32
    %140 = vector.broadcast %cst_29 : f32 to vector<8x128xf32>
    %141 = arith.addf %140, %139 : vector<8x128xf32>
    %142 = arith.divf %140, %141 : vector<8x128xf32>
    %143 = vector.extract_strided_slice %132 {offsets = [0, 128], sizes = [8, 128], strides = [1, 1]} : vector<8x384xf32> to vector<8x128xf32>
    %144 = vector.extract_strided_slice %134 {offsets = [0, 128], sizes = [8, 128], strides = [1, 1]} : vector<8x384xf32> to vector<8x128xf32>
    %145 = arith.addf %143, %144 : vector<8x128xf32>
    %146 = arith.negf %145 : vector<8x128xf32>
    %147 = math.exp %146 : vector<8x128xf32>
    %cst_30 = arith.constant 1.000000e+00 : f32
    %148 = vector.broadcast %cst_30 : f32 to vector<8x128xf32>
    %149 = arith.addf %148, %147 : vector<8x128xf32>
    %150 = arith.divf %148, %149 : vector<8x128xf32>
    %151 = vector.extract_strided_slice %132 {offsets = [0, 256], sizes = [8, 128], strides = [1, 1]} : vector<8x384xf32> to vector<8x128xf32>
    %152 = vector.extract_strided_slice %134 {offsets = [0, 256], sizes = [8, 128], strides = [1, 1]} : vector<8x384xf32> to vector<8x128xf32>
    %153 = vector.broadcast %4 : vector<1x128xf32> to vector<8x128xf32>
    %154 = arith.addf %152, %153 : vector<8x128xf32>
    %155 = arith.mulf %142, %154 : vector<8x128xf32>
    %156 = arith.addf %151, %155 : vector<8x128xf32>
    %157 = math.tanh %156 : vector<8x128xf32>
    %158 = arith.subf %129, %157 : vector<8x128xf32>
    %159 = arith.mulf %150, %158 : vector<8x128xf32>
    %160 = arith.addf %157, %159 : vector<8x128xf32>
    %c5_i32 = arith.constant 5 : i32
    %161 = arith.index_cast %c5_i32 : i32 to index
    %c0_31 = arith.constant 0 : index
    %c0_32 = arith.constant 0 : index
    %162 = vector.load %arg2[%161, %c0_31, %c0_32] : memref<8x8x384xf32, #tpu.memory_space<vmem>>, vector<1x8x384xf32>
    %163 = vector.shape_cast %162 : vector<1x8x384xf32> to vector<8x384xf32>
    %164 = arith.truncf %160 : vector<8x128xf32> to vector<8x128xbf16>
    %cst_33 = arith.constant dense<0.000000e+00> : vector<8x384xf32>
    %165 = tpu.matmul %164, %3, %cst_33 {dimension_numbers = #tpu.dot_dimension_numbers<[1], [0], [0], [1], [0, 0, 1, 1], [], []>} : vector<8x128xbf16>, vector<128x384xbf16>, vector<8x384xf32> -> vector<8x384xf32>
    %166 = vector.extract_strided_slice %163 {offsets = [0, 0], sizes = [8, 128], strides = [1, 1]} : vector<8x384xf32> to vector<8x128xf32>
    %167 = vector.extract_strided_slice %165 {offsets = [0, 0], sizes = [8, 128], strides = [1, 1]} : vector<8x384xf32> to vector<8x128xf32>
    %168 = arith.addf %166, %167 : vector<8x128xf32>
    %169 = arith.negf %168 : vector<8x128xf32>
    %170 = math.exp %169 : vector<8x128xf32>
    %cst_34 = arith.constant 1.000000e+00 : f32
    %171 = vector.broadcast %cst_34 : f32 to vector<8x128xf32>
    %172 = arith.addf %171, %170 : vector<8x128xf32>
    %173 = arith.divf %171, %172 : vector<8x128xf32>
    %174 = vector.extract_strided_slice %163 {offsets = [0, 128], sizes = [8, 128], strides = [1, 1]} : vector<8x384xf32> to vector<8x128xf32>
    %175 = vector.extract_strided_slice %165 {offsets = [0, 128], sizes = [8, 128], strides = [1, 1]} : vector<8x384xf32> to vector<8x128xf32>
    %176 = arith.addf %174, %175 : vector<8x128xf32>
    %177 = arith.negf %176 : vector<8x128xf32>
    %178 = math.exp %177 : vector<8x128xf32>
    %cst_35 = arith.constant 1.000000e+00 : f32
    %179 = vector.broadcast %cst_35 : f32 to vector<8x128xf32>
    %180 = arith.addf %179, %178 : vector<8x128xf32>
    %181 = arith.divf %179, %180 : vector<8x128xf32>
    %182 = vector.extract_strided_slice %163 {offsets = [0, 256], sizes = [8, 128], strides = [1, 1]} : vector<8x384xf32> to vector<8x128xf32>
    %183 = vector.extract_strided_slice %165 {offsets = [0, 256], sizes = [8, 128], strides = [1, 1]} : vector<8x384xf32> to vector<8x128xf32>
    %184 = vector.broadcast %4 : vector<1x128xf32> to vector<8x128xf32>
    %185 = arith.addf %183, %184 : vector<8x128xf32>
    %186 = arith.mulf %173, %185 : vector<8x128xf32>
    %187 = arith.addf %182, %186 : vector<8x128xf32>
    %188 = math.tanh %187 : vector<8x128xf32>
    %189 = arith.subf %160, %188 : vector<8x128xf32>
    %190 = arith.mulf %181, %189 : vector<8x128xf32>
    %191 = arith.addf %188, %190 : vector<8x128xf32>
    %c6_i32 = arith.constant 6 : i32
    %192 = arith.index_cast %c6_i32 : i32 to index
    %c0_36 = arith.constant 0 : index
    %c0_37 = arith.constant 0 : index
    %193 = vector.load %arg2[%192, %c0_36, %c0_37] : memref<8x8x384xf32, #tpu.memory_space<vmem>>, vector<1x8x384xf32>
    %194 = vector.shape_cast %193 : vector<1x8x384xf32> to vector<8x384xf32>
    %195 = arith.truncf %191 : vector<8x128xf32> to vector<8x128xbf16>
    %cst_38 = arith.constant dense<0.000000e+00> : vector<8x384xf32>
    %196 = tpu.matmul %195, %3, %cst_38 {dimension_numbers = #tpu.dot_dimension_numbers<[1], [0], [0], [1], [0, 0, 1, 1], [], []>} : vector<8x128xbf16>, vector<128x384xbf16>, vector<8x384xf32> -> vector<8x384xf32>
    %197 = vector.extract_strided_slice %194 {offsets = [0, 0], sizes = [8, 128], strides = [1, 1]} : vector<8x384xf32> to vector<8x128xf32>
    %198 = vector.extract_strided_slice %196 {offsets = [0, 0], sizes = [8, 128], strides = [1, 1]} : vector<8x384xf32> to vector<8x128xf32>
    %199 = arith.addf %197, %198 : vector<8x128xf32>
    %200 = arith.negf %199 : vector<8x128xf32>
    %201 = math.exp %200 : vector<8x128xf32>
    %cst_39 = arith.constant 1.000000e+00 : f32
    %202 = vector.broadcast %cst_39 : f32 to vector<8x128xf32>
    %203 = arith.addf %202, %201 : vector<8x128xf32>
    %204 = arith.divf %202, %203 : vector<8x128xf32>
    %205 = vector.extract_strided_slice %194 {offsets = [0, 128], sizes = [8, 128], strides = [1, 1]} : vector<8x384xf32> to vector<8x128xf32>
    %206 = vector.extract_strided_slice %196 {offsets = [0, 128], sizes = [8, 128], strides = [1, 1]} : vector<8x384xf32> to vector<8x128xf32>
    %207 = arith.addf %205, %206 : vector<8x128xf32>
    %208 = arith.negf %207 : vector<8x128xf32>
    %209 = math.exp %208 : vector<8x128xf32>
    %cst_40 = arith.constant 1.000000e+00 : f32
    %210 = vector.broadcast %cst_40 : f32 to vector<8x128xf32>
    %211 = arith.addf %210, %209 : vector<8x128xf32>
    %212 = arith.divf %210, %211 : vector<8x128xf32>
    %213 = vector.extract_strided_slice %194 {offsets = [0, 256], sizes = [8, 128], strides = [1, 1]} : vector<8x384xf32> to vector<8x128xf32>
    %214 = vector.extract_strided_slice %196 {offsets = [0, 256], sizes = [8, 128], strides = [1, 1]} : vector<8x384xf32> to vector<8x128xf32>
    %215 = vector.broadcast %4 : vector<1x128xf32> to vector<8x128xf32>
    %216 = arith.addf %214, %215 : vector<8x128xf32>
    %217 = arith.mulf %204, %216 : vector<8x128xf32>
    %218 = arith.addf %213, %217 : vector<8x128xf32>
    %219 = math.tanh %218 : vector<8x128xf32>
    %220 = arith.subf %191, %219 : vector<8x128xf32>
    %221 = arith.mulf %212, %220 : vector<8x128xf32>
    %222 = arith.addf %219, %221 : vector<8x128xf32>
    %c7_i32 = arith.constant 7 : i32
    %223 = arith.index_cast %c7_i32 : i32 to index
    %c0_41 = arith.constant 0 : index
    %c0_42 = arith.constant 0 : index
    %224 = vector.load %arg2[%223, %c0_41, %c0_42] : memref<8x8x384xf32, #tpu.memory_space<vmem>>, vector<1x8x384xf32>
    %225 = vector.shape_cast %224 : vector<1x8x384xf32> to vector<8x384xf32>
    %226 = arith.truncf %222 : vector<8x128xf32> to vector<8x128xbf16>
    %cst_43 = arith.constant dense<0.000000e+00> : vector<8x384xf32>
    %227 = tpu.matmul %226, %3, %cst_43 {dimension_numbers = #tpu.dot_dimension_numbers<[1], [0], [0], [1], [0, 0, 1, 1], [], []>} : vector<8x128xbf16>, vector<128x384xbf16>, vector<8x384xf32> -> vector<8x384xf32>
    %228 = vector.extract_strided_slice %225 {offsets = [0, 0], sizes = [8, 128], strides = [1, 1]} : vector<8x384xf32> to vector<8x128xf32>
    %229 = vector.extract_strided_slice %227 {offsets = [0, 0], sizes = [8, 128], strides = [1, 1]} : vector<8x384xf32> to vector<8x128xf32>
    %230 = arith.addf %228, %229 : vector<8x128xf32>
    %231 = arith.negf %230 : vector<8x128xf32>
    %232 = math.exp %231 : vector<8x128xf32>
    %cst_44 = arith.constant 1.000000e+00 : f32
    %233 = vector.broadcast %cst_44 : f32 to vector<8x128xf32>
    %234 = arith.addf %233, %232 : vector<8x128xf32>
    %235 = arith.divf %233, %234 : vector<8x128xf32>
    %236 = vector.extract_strided_slice %225 {offsets = [0, 128], sizes = [8, 128], strides = [1, 1]} : vector<8x384xf32> to vector<8x128xf32>
    %237 = vector.extract_strided_slice %227 {offsets = [0, 128], sizes = [8, 128], strides = [1, 1]} : vector<8x384xf32> to vector<8x128xf32>
    %238 = arith.addf %236, %237 : vector<8x128xf32>
    %239 = arith.negf %238 : vector<8x128xf32>
    %240 = math.exp %239 : vector<8x128xf32>
    %cst_45 = arith.constant 1.000000e+00 : f32
    %241 = vector.broadcast %cst_45 : f32 to vector<8x128xf32>
    %242 = arith.addf %241, %240 : vector<8x128xf32>
    %243 = arith.divf %241, %242 : vector<8x128xf32>
    %244 = vector.extract_strided_slice %225 {offsets = [0, 256], sizes = [8, 128], strides = [1, 1]} : vector<8x384xf32> to vector<8x128xf32>
    %245 = vector.extract_strided_slice %227 {offsets = [0, 256], sizes = [8, 128], strides = [1, 1]} : vector<8x384xf32> to vector<8x128xf32>
    %246 = vector.broadcast %4 : vector<1x128xf32> to vector<8x128xf32>
    %247 = arith.addf %245, %246 : vector<8x128xf32>
    %248 = arith.mulf %235, %247 : vector<8x128xf32>
    %249 = arith.addf %244, %248 : vector<8x128xf32>
    %250 = math.tanh %249 : vector<8x128xf32>
    %251 = arith.subf %222, %250 : vector<8x128xf32>
    %252 = arith.mulf %243, %251 : vector<8x128xf32>
    %253 = arith.addf %250, %252 : vector<8x128xf32>
    %c8_i32 = arith.constant 8 : i32
    %c0_46 = arith.constant 0 : index
    %c0_47 = arith.constant 0 : index
    %254 = vector.load %arg5[%c0_46, %c0_47] : memref<8x128xf32, #tpu.memory_space<vmem>>, vector<8x128xf32>
    tpu.vector_store %arg5[%c0_46, %c0_47], %253 {strides = array<i32>} : memref<8x128xf32, #tpu.memory_space<vmem>>, vector<8x128xf32>,
    return
  }
  func.func @transform_0(%arg0: i32, %arg1: i32) -> (i32, i32, i32) {
    %c0_i32 = arith.constant 0 : i32
    %c0_i32_0 = arith.constant 0 : i32
    return %arg1, %arg0, %c0_i32 : i32, i32, i32
  }
  func.func @transform_1(%arg0: i32, %arg1: i32) -> (i32, i32) {
    %c0_i32 = arith.constant 0 : i32
    %c0_i32_0 = arith.constant 0 : i32
    %c0_i32_1 = arith.constant 0 : i32
    return %c0_i32, %c0_i32_0 : i32, i32
  }
  func.func @transform_2(%arg0: i32, %arg1: i32) -> (i32, i32) {
    %c0_i32 = arith.constant 0 : i32
    %c0_i32_0 = arith.constant 0 : i32
    %c0_i32_1 = arith.constant 0 : i32
    return %c0_i32, %c0_i32_0 : i32, i32
  }
  func.func @transform_3(%arg0: i32, %arg1: i32) -> (i32, i32) {
    %c0_i32 = arith.constant 0 : i32
    %c0_i32_0 = arith.constant 0 : i32
    return %arg0, %c0_i32 : i32, i32
  }
}

</mosaic_0001>

<llo_original>
// kernel: tpu_custom_call.1
$region0: #{tpu_custom_call.1}
  #allocation0 [shape = 'u32[]', space=smem, size = 0x4, offset = 0x4, fixed_abs, tag = 'smem constant byte address 0x4 - core index']
  #allocation1 [shape = 'u32[144,128]{1,0:T(1,128)}', space=vmem, size = 0x12000, scoped, tag = 'internal scratch']
  %s0 = inlined_call_operand.hbm [shape: f32[8,8,384], index: 0, kind: input, shape index: {}]
  %s1 = inlined_call_operand.hbm [shape: bf16[128,384], index: 1, kind: input, shape index: {}]
  %s2 = inlined_call_operand.vmem [shape: f32[1,128], index: 2, kind: input, shape index: {}]
  %s3 = inlined_call_operand.hbm [shape: f32[8,128], index: 3, kind: output, shape index: {}]
  %s4 = sld [smem:[#allocation0]]
  $region34: #{tpu_custom_call.1} parent=0
    _
  %s6 = ssub.s32 1, %s4
  %s7 = scalar_select 0, %s6, %s4
  $region1: #{tpu_custom_call.1} parent=0
    #allocation2 [shape = 'u8[98304]{0}', space=vmem, size = 0x18000, scoped, tag = 'input window, operand 0, single buffered']
    #allocation3 [shape = 's32[1]{0}', space=sflag, size = 0x4, scoped, tag = 'scoped memory for tpu_custom_call.1']
    #allocation4 [shape = 's32[1]{0}', space=sflag, size = 0x4, scoped, tag = 'scoped memory for tpu_custom_call.1']
    #allocation5 [shape = 'u8[98304]{0}', space=vmem, size = 0x18000, scoped, tag = 'input window, operand 1, single buffered']
    #allocation6 [shape = 's32[1]{0}', space=sflag, size = 0x4, scoped, tag = 'scoped memory for tpu_custom_call.1']
    #allocation7 [shape = 'u8[4096]{0}', space=vmem, size = 0x1000, scoped, tag = 'output window, operand 0, single buffered']
    %8 = vsyncpa [#allocation3], 0
    %9 = vsyncpa [#allocation6], 0
    %10 = vsyncpa [#allocation4], 0
    // Predicated region
    $region2: #{tpu_custom_call.1} parent=1 // pred_check
      _
    $region3: #{tpu_custom_call.1} parent=1 // pred_check_branch
      %12 = sbr.rel (0) target = $region5
    $region4: #{tpu_custom_call.1} parent=1 // pred_region
      %s14 = ssub.s32 3072, 3072
      %15 = vsyncadd [#allocation3], %s14
      %s16 = sshll.u32 [#allocation2], 4
      %s17 = int_to_ptr.vmem [resolvable:$true] %s16
      %22 = dma.hbm_to_vmem [thread:$0]  %s0, 3072, %s17, [#allocation3], 384, 384, 24
    $region5: #{tpu_custom_call.1} parent=1 // pred_fallthru
      _
    // Predicated region
    $region6: #{tpu_custom_call.1} parent=1 // pred_check
      _
    $region7: #{tpu_custom_call.1} parent=1 // pred_check_branch
      %24 = sbr.rel (0) target = $region9
    $region8: #{tpu_custom_call.1} parent=1 // pred_region
      %s26 = ssub.s32 3072, 3072
      %27 = vsyncadd [#allocation6], %s26
      %s28 = sshll.u32 [#allocation5], 4
      %s29 = int_to_ptr.vmem [resolvable:$true] %s28
      %34 = dma.hbm_to_vmem [thread:$0]  %s1, 3072, %s29, [#allocation6], 192, 192, 12
    $region9: #{tpu_custom_call.1} parent=1 // pred_fallthru
      _
    // Predicated region
    $region10: #{tpu_custom_call.1} parent=1 // pred_check
      _
    $region11: #{tpu_custom_call.1} parent=1 // pred_check_branch
      %36 = sbr.rel (0) target = $region13
    $region12: #{tpu_custom_call.1} parent=1 // pred_region
      _
    $region13: #{tpu_custom_call.1} parent=1 // pred_fallthru
      _
    // Predicated region
    $region14: #{tpu_custom_call.1} parent=1 // pred_check
      _
    $region15: #{tpu_custom_call.1} parent=1 // pred_check_branch
      %38 = sbr.rel (0) target = $region17
    $region16: #{tpu_custom_call.1} parent=1 // pred_region
      %39 = dma.done [#allocation3], 3072
    $region17: #{tpu_custom_call.1} parent=1 // pred_fallthru
      _
    // Predicated region
    $region18: #{tpu_custom_call.1} parent=1 // pred_check
      _
    $region19: #{tpu_custom_call.1} parent=1 // pred_check_branch
      %41 = sbr.rel (0) target = $region21
    $region20: #{tpu_custom_call.1} parent=1 // pred_region
      %42 = dma.done [#allocation6], 3072
    $region21: #{tpu_custom_call.1} parent=1 // pred_fallthru
      _
    %p44 = scmp.eq.s32.totalorder 0, 0
    // Predicated region
    $region22: #{tpu_custom_call.1} parent=1 // pred_check
      %p45 = pneg %p44
    $region23: #{tpu_custom_call.1} parent=1 // pred_check_branch
      %47 = sbr.rel (%p45) target = $region25
    $region24: #{tpu_custom_call.1} parent=1 // pred_region
      %48 = vst [vmem:[#allocation7] sm:$0xff] 0.0
    $region25: #{tpu_custom_call.1} parent=1 // pred_fallthru
      _
    %v49 = vld [vmem:[#allocation5] sm:$0xff]
    %v50 = vld [vmem:[#allocation5 + $0x8] sm:$0xf]
    %v51 = vld [vmem:[#allocation5 + $0xc] sm:$0xff]
    %v52 = vld [vmem:[#allocation5 + $0x14] sm:$0xf]
    %v53 = vld [vmem:[#allocation5 + $0x18] sm:$0xff]
    %v54 = vld [vmem:[#allocation5 + $0x20] sm:$0xf]
    %v55 = vld [vmem:[#allocation5 + $0x24] sm:$0xff]
    %v56 = vld [vmem:[#allocation5 + $0x2c] sm:$0xf]
    %v57 = vld [vmem:[#allocation5 + $0x30] sm:$0xff]
    %v58 = vld [vmem:[#allocation5 + $0x38] sm:$0xf]
    %v59 = vld [vmem:[#allocation5 + $0x3c] sm:$0xff]
    %v60 = vld [vmem:[#allocation5 + $0x44] sm:$0xf]
    %v61 = vld [vmem:[#allocation5 + $0x48] sm:$0xff]
    %v62 = vld [vmem:[#allocation5 + $0x50] sm:$0xf]
    %v63 = vld [vmem:[#allocation5 + $0x54] sm:$0xff]
    %v64 = vld [vmem:[#allocation5 + $0x5c] sm:$0xf]
    %v65 = vld [vmem:[#allocation5 + $0x60] sm:$0xff]
    %v66 = vld [vmem:[#allocation5 + $0x68] sm:$0xf]
    %v67 = vld [vmem:[#allocation5 + $0x6c] sm:$0xff]
    %v68 = vld [vmem:[#allocation5 + $0x74] sm:$0xf]
    %v69 = vld [vmem:[#allocation5 + $0x78] sm:$0xff]
    %v70 = vld [vmem:[#allocation5 + $0x80] sm:$0xf]
    %v71 = vld [vmem:[#allocation5 + $0x84] sm:$0xff]
    %v72 = vld [vmem:[#allocation5 + $0x8c] sm:$0xf]
    %v73 = vld [vmem:[#allocation5 + $0x90] sm:$0xff]
    %v74 = vld [vmem:[#allocation5 + $0x98] sm:$0xf]
    %v75 = vld [vmem:[#allocation5 + $0x9c] sm:$0xff]
    %v76 = vld [vmem:[#allocation5 + $0xa4] sm:$0xf]
    %v77 = vld [vmem:[#allocation5 + $0xa8] sm:$0xff]
    %v78 = vld [vmem:[#allocation5 + $0xb0] sm:$0xf]
    %v79 = vld [vmem:[#allocation5 + $0xb4] sm:$0xff]
    %v80 = vld [vmem:[#allocation5 + $0xbc] sm:$0xf]
    %v81 = vld [vmem:[%s2] sm:$0x1]
    %v82 = vld [vmem:[#allocation7] sm:$0xff]
    %v83 = vld [vmem:[#allocation2] sm:$0xff]
    %v84 = vld [vmem:[#allocation2 + $0x8] sm:$0xff]
    %v85 = vld [vmem:[#allocation2 + $0x10] sm:$0xff]
    %v86 = vpack.c.bf16 %v82, %v82
    %v119 = vunpack.c.l.b16 %v49
    %v120 = vunpack.c.h.b16 %v49
    %v121 = vunpack.c.l.b16 %v50
    %v122 = vunpack.c.l.b16 %v51
    %v123 = vunpack.c.h.b16 %v51
    %v124 = vunpack.c.l.b16 %v52
    %v125 = vunpack.c.l.b16 %v53
    %v126 = vunpack.c.h.b16 %v53
    %v127 = vunpack.c.l.b16 %v54
    %v128 = vunpack.c.l.b16 %v55
    %v129 = vunpack.c.h.b16 %v55
    %v130 = vunpack.c.l.b16 %v56
    %v131 = vunpack.c.l.b16 %v57
    %v132 = vunpack.c.h.b16 %v57
    %v133 = vunpack.c.l.b16 %v58
    %v134 = vunpack.c.l.b16 %v59
    %v135 = vunpack.c.h.b16 %v59
    %v136 = vunpack.c.l.b16 %v60
    %v137 = vunpack.c.l.b16 %v61
    %v138 = vunpack.c.h.b16 %v61
    %v139 = vunpack.c.l.b16 %v62
    %v140 = vunpack.c.l.b16 %v63
    %v141 = vunpack.c.h.b16 %v63
    %v142 = vunpack.c.l.b16 %v64
    %v143 = vunpack.c.l.b16 %v65
    %v144 = vunpack.c.h.b16 %v65
    %v145 = vunpack.c.l.b16 %v66
    %v146 = vunpack.c.l.b16 %v67
    %v147 = vunpack.c.h.b16 %v67
    %v148 = vunpack.c.l.b16 %v68
    %v149 = vunpack.c.l.b16 %v69
    %v150 = vunpack.c.h.b16 %v69
    %v151 = vunpack.c.l.b16 %v70
    %v152 = vunpack.c.l.b16 %v71
    %v153 = vunpack.c.h.b16 %v71
    %v154 = vunpack.c.l.b16 %v72
    %v155 = vunpack.c.l.b16 %v73
    %v156 = vunpack.c.h.b16 %v73
    %v157 = vunpack.c.l.b16 %v74
    %v158 = vunpack.c.l.b16 %v75
    %v159 = vunpack.c.h.b16 %v75
    %v160 = vunpack.c.l.b16 %v76
    %v161 = vunpack.c.l.b16 %v77
    %v162 = vunpack.c.h.b16 %v77
    %v163 = vunpack.c.l.b16 %v78
    %v164 = vunpack.c.l.b16 %v79
    %v165 = vunpack.c.h.b16 %v79
    %v166 = vunpack.c.l.b16 %v80
    %v167 = vpack.c.b16 %v122, %v119
    %v168 = vpack.c.b16 %v123, %v120
    %v169 = vpack.c.b16 %v124, %v121
    %v170 = vpack.c.b16 %v128, %v125
    %v171 = vpack.c.b16 %v129, %v126
    %v172 = vpack.c.b16 %v130, %v127
    %v173 = vpack.c.b16 %v134, %v131
    %v174 = vpack.c.b16 %v135, %v132
    %v175 = vpack.c.b16 %v136, %v133
    %v176 = vpack.c.b16 %v140, %v137
    %v177 = vpack.c.b16 %v141, %v138
    %v178 = vpack.c.b16 %v142, %v139
    %v179 = vpack.c.b16 %v146, %v143
    %v180 = vpack.c.b16 %v147, %v144
    %v181 = vpack.c.b16 %v148, %v145
    %v182 = vpack.c.b16 %v152, %v149
    %v183 = vpack.c.b16 %v153, %v150
    %v184 = vpack.c.b16 %v154, %v151
    %v185 = vpack.c.b16 %v158, %v155
    %v186 = vpack.c.b16 %v159, %v156
    %v187 = vpack.c.b16 %v160, %v157
    %v188 = vpack.c.b16 %v164, %v161
    %v189 = vpack.c.b16 %v165, %v162
    %v190 = vpack.c.b16 %v166, %v163
    %215 = vmatprep.subr.bf16.mxu0 %v189
    %216 = vmatpush1.bf16.msra.mxu0 %v188
    %217 = vmatprep.subr.bf16.mxu0 %v186
    %218 = vmatpush1.bf16.msra.mxu0 %v185
    %219 = vmatprep.subr.bf16.mxu0 %v183
    %220 = vmatpush1.bf16.msra.mxu0 %v182
    %221 = vmatprep.subr.bf16.mxu0 %v180
    %222 = vmatpush1.bf16.msra.mxu0 %v179
    %223 = vmatprep.subr.bf16.mxu0 %v177
    %224 = vmatpush1.bf16.msra.mxu0 %v176
    %225 = vmatprep.subr.bf16.mxu0 %v174
    %226 = vmatpush1.bf16.msra.mxu0 %v173
    %227 = vmatprep.subr.bf16.mxu0 %v171
    %228 = vmatpush1.bf16.msra.mxu0 %v170
    %229 = vmatprep.subr.bf16.mxu0 %v168
    %230 = vmatpush1.bf16.msra.mxu0 %v167
    %231 = vmatprep.subr.bf16.mxu0 0
    %232 = vmatpush2.bf16.msra.mxu0 0
    %233 = vmatprep.subr.bf16.mxu0 0
    %234 = vmatpush2.bf16.msra.mxu0 0
    %235 = vmatprep.subr.bf16.mxu0 0
    %236 = vmatpush2.bf16.msra.mxu0 0
    %237 = vmatprep.subr.bf16.mxu0 0
    %238 = vmatpush2.bf16.msra.mxu0 0
    %239 = vmatprep.subr.bf16.mxu0 0
    %240 = vmatpush2.bf16.msra.mxu0 0
    %241 = vmatprep.subr.bf16.mxu0 0
    %242 = vmatpush2.bf16.msra.mxu0 0
    %243 = vmatprep.subr.bf16.mxu0 0
    %244 = vmatpush2.bf16.msra.mxu0 0
    %245 = vmatprep.subr.bf16.mxu0 0
    %246 = vmatpush2.bf16.msra.mxu0 0
    %247 = vmatprep.mubr.bf16.mxu0 0
    %248 = vmatmul.mubr.bf16.gmra.mxu0 %v86
    %v249 = vpop.f32.mrf.mxu0
    %v250 = vadd.f32 0.0, %v249
    %v251 = vpop.f32.mrf.mxu0
    %v252 = vadd.f32 0.0, %v251
    %v253 = vpop.f32.mrf.mxu0
    %v254 = vpop.f32.mrf.mxu0
    %255 = vdwg.mxu0
    %256 = vmatprep.subr.bf16.mxu0 0
    %257 = vmatpush1.bf16.msra.mxu0 %v190
    %258 = vmatprep.subr.bf16.mxu0 0
    %259 = vmatpush1.bf16.msra.mxu0 %v187
    %260 = vmatprep.subr.bf16.mxu0 0
    %261 = vmatpush1.bf16.msra.mxu0 %v184
    %262 = vmatprep.subr.bf16.mxu0 0
    %263 = vmatpush1.bf16.msra.mxu0 %v181
    %264 = vmatprep.subr.bf16.mxu0 0
    %265 = vmatpush1.bf16.msra.mxu0 %v178
    %266 = vmatprep.subr.bf16.mxu0 0
    %267 = vmatpush1.bf16.msra.mxu0 %v175
    %268 = vmatprep.subr.bf16.mxu0 0
    %269 = vmatpush1.bf16.msra.mxu0 %v172
    %270 = vmatprep.subr.bf16.mxu0 0
    %271 = vmatpush1.bf16.msra.mxu0 %v169
    %272 = vmatprep.subr.bf16.mxu0 0
    %273 = vmatpush2.bf16.msra.mxu0 0
    %274 = vmatprep.subr.bf16.mxu0 0
    %275 = vmatpush2.bf16.msra.mxu0 0
    %276 = vmatprep.subr.bf16.mxu0 0
    %277 = vmatpush2.bf16.msra.mxu0 0
    %278 = vmatprep.subr.bf16.mxu0 0
    %279 = vmatpush2.bf16.msra.mxu0 0
    %280 = vmatprep.subr.bf16.mxu0 0
    %281 = vmatpush2.bf16.msra.mxu0 0
    %282 = vmatprep.subr.bf16.mxu0 0
    %283 = vmatpush2.bf16.msra.mxu0 0
    %284 = vmatprep.subr.bf16.mxu0 0
    %285 = vmatpush2.bf16.msra.mxu0 0
    %286 = vmatprep.subr.bf16.mxu0 0
    %287 = vmatpush2.bf16.msra.mxu0 0
    %288 = vmatprep.mubr.bf16.mxu0 0
    %289 = vmatmul.mubr.bf16.gmra.mxu0 %v86
    %v290 = vpop.f32.mrf.mxu0
    %v291 = vadd.f32 0.0, %v290
    %v292 = vpop.f32.mrf.mxu0
    %v293 = vpop.f32.mrf.mxu0
    %v294 = vpop.f32.mrf.mxu0
    %295 = vdwg.mxu0
    %v296 = vadd.f32 %v83, %v250
    %v297 = vxor.u32 %v296, 2147483648
    %v298 = vmul.f32 %v297, 1.442695
    %v299 = vpow.pop %v298
    %v300 = vadd.f32 %v299, 1.0
    %v301 = vrcp.pop %v300
    %v302 = vmul.f32 1.0, %v301
    %v303 = vadd.f32 %v84, %v252
    %v304 = vxor.u32 %v303, 2147483648
    %v305 = vmul.f32 %v304, 1.442695
    %v306 = vpow.pop %v305
    %v307 = vadd.f32 %v306, 1.0
    %v308 = vrcp.pop %v307
    %v309 = vmul.f32 1.0, %v308
    %v311 = vlaneseq
    %v312 = vshrl.u32 %v311, 7
    %v313 = vsub.s32 0, %v312
    %v314 = vrot.slane %v81, %v313
    %v316 = vadd.f32 %v291, %v314
    %v317 = vmul.f32 %v302, %v316
    %v318 = vadd.f32 %v85, %v317
    %v319 = vtanh.pop %v318
    %v320 = vsub.f32 %v82, %v319
    %v321 = vmul.f32 %v309, %v320
    %v322 = vadd.f32 %v319, %v321
    %s323 = scalar_lea.vmem [#allocation2], 24
    %v324 = vld [vmem:[%s323] sm:$0xff]
    %v325 = vld [vmem:[%s323 + $0x8] sm:$0xff]
    %v326 = vld [vmem:[%s323 + $0x10] sm:$0xff]
    %v327 = vpack.c.bf16 %v322, %v322
    %328 = vmatprep.subr.bf16.mxu0 %v189
    %329 = vmatpush1.bf16.msra.mxu0 %v188
    %330 = vmatprep.subr.bf16.mxu0 %v186
    %331 = vmatpush1.bf16.msra.mxu0 %v185
    %332 = vmatprep.subr.bf16.mxu0 %v183
    %333 = vmatpush1.bf16.msra.mxu0 %v182
    %334 = vmatprep.subr.bf16.mxu0 %v180
    %335 = vmatpush1.bf16.msra.mxu0 %v179
    %336 = vmatprep.subr.bf16.mxu0 %v177
    %337 = vmatpush1.bf16.msra.mxu0 %v176
    %338 = vmatprep.subr.bf16.mxu0 %v174
    %339 = vmatpush1.bf16.msra.mxu0 %v173
    %340 = vmatprep.subr.bf16.mxu0 %v171
    %341 = vmatpush1.bf16.msra.mxu0 %v170
    %342 = vmatprep.subr.bf16.mxu0 %v168
    %343 = vmatpush1.bf16.msra.mxu0 %v167
    %344 = vmatprep.subr.bf16.mxu0 0
    %345 = vmatpush2.bf16.msra.mxu0 0
    %346 = vmatprep.subr.bf16.mxu0 0
    %347 = vmatpush2.bf16.msra.mxu0 0
    %348 = vmatprep.subr.bf16.mxu0 0
    %349 = vmatpush2.bf16.msra.mxu0 0
    %350 = vmatprep.subr.bf16.mxu0 0
    %351 = vmatpush2.bf16.msra.mxu0 0
    %352 = vmatprep.subr.bf16.mxu0 0
    %353 = vmatpush2.bf16.msra.mxu0 0
    %354 = vmatprep.subr.bf16.mxu0 0
    %355 = vmatpush2.bf16.msra.mxu0 0
    %356 = vmatprep.subr.bf16.mxu0 0
    %357 = vmatpush2.bf16.msra.mxu0 0
    %358 = vmatprep.subr.bf16.mxu0 0
    %359 = vmatpush2.bf16.msra.mxu0 0
    %360 = vmatprep.mubr.bf16.mxu0 0
    %361 = vmatmul.mubr.bf16.gmra.mxu0 %v327
    %v362 = vpop.f32.mrf.mxu0
    %v363 = vadd.f32 0.0, %v362
    %v364 = vpop.f32.mrf.mxu0
    %v365 = vadd.f32 0.0, %v364
    %v366 = vpop.f32.mrf.mxu0
    %v367 = vpop.f32.mrf.mxu0
    %368 = vdwg.mxu0
    %369 = vmatprep.subr.bf16.mxu0 0
    %370 = vmatpush1.bf16.msra.mxu0 %v190
    %371 = vmatprep.subr.bf16.mxu0 0
    %372 = vmatpush1.bf16.msra.mxu0 %v187
    %373 = vmatprep.subr.bf16.mxu0 0
    %374 = vmatpush1.bf16.msra.mxu0 %v184
    %375 = vmatprep.subr.bf16.mxu0 0
    %376 = vmatpush1.bf16.msra.mxu0 %v181
    %377 = vmatprep.subr.bf16.mxu0 0
    %378 = vmatpush1.bf16.msra.mxu0 %v178
    %379 = vmatprep.subr.bf16.mxu0 0
    %380 = vmatpush1.bf16.msra.mxu0 %v175
    %381 = vmatprep.subr.bf16.mxu0 0
    %382 = vmatpush1.bf16.msra.mxu0 %v172
    %383 = vmatprep.subr.bf16.mxu0 0
    %384 = vmatpush1.bf16.msra.mxu0 %v169
    %385 = vmatprep.subr.bf16.mxu0 0
    %386 = vmatpush2.bf16.msra.mxu0 0
    %387 = vmatprep.subr.bf16.mxu0 0
    %388 = vmatpush2.bf16.msra.mxu0 0
    %389 = vmatprep.subr.bf16.mxu0 0
    %390 = vmatpush2.bf16.msra.mxu0 0
    %391 = vmatprep.subr.bf16.mxu0 0
    %392 = vmatpush2.bf16.msra.mxu0 0
    %393 = vmatprep.subr.bf16.mxu0 0
    %394 = vmatpush2.bf16.msra.mxu0 0
    %395 = vmatprep.subr.bf16.mxu0 0
    %396 = vmatpush2.bf16.msra.mxu0 0
    %397 = vmatprep.subr.bf16.mxu0 0
    %398 = vmatpush2.bf16.msra.mxu0 0
    %399 = vmatprep.subr.bf16.mxu0 0
    %400 = vmatpush2.bf16.msra.mxu0 0
    %401 = vmatprep.mubr.bf16.mxu0 0
    %402 = vmatmul.mubr.bf16.gmra.mxu0 %v327
    %v403 = vpop.f32.mrf.mxu0
    %v404 = vadd.f32 0.0, %v403
    %v405 = vpop.f32.mrf.mxu0
    %v406 = vpop.f32.mrf.mxu0
    %v407 = vpop.f32.mrf.mxu0
    %408 = vdwg.mxu0
    %v409 = vadd.f32 %v324, %v363
    %v410 = vxor.u32 %v409, 2147483648
    %v411 = vmul.f32 %v410, 1.442695
    %v412 = vpow.pop %v411
    %v413 = vadd.f32 %v412, 1.0
    %v414 = vrcp.pop %v413
    %v415 = vmul.f32 1.0, %v414
    %v416 = vadd.f32 %v325, %v365
    %v417 = vxor.u32 %v416, 2147483648
    %v418 = vmul.f32 %v417, 1.442695
    %v419 = vpow.pop %v418
    %v420 = vadd.f32 %v419, 1.0
    %v421 = vrcp.pop %v420
    %v422 = vmul.f32 1.0, %v421
    %v423 = vadd.f32 %v404, %v314
    %v424 = vmul.f32 %v415, %v423
    %v425 = vadd.f32 %v326, %v424
    %v426 = vtanh.pop %v425
    %v427 = vsub.f32 %v322, %v426
    %v428 = vmul.f32 %v422, %v427
    %v429 = vadd.f32 %v426, %v428
    %s430 = scalar_lea.vmem [#allocation2], 48
    %v431 = vld [vmem:[%s430] sm:$0xff]
    %v432 = vld [vmem:[%s430 + $0x8] sm:$0xff]
    %v433 = vld [vmem:[%s430 + $0x10] sm:$0xff]
    %v434 = vpack.c.bf16 %v429, %v429
    %435 = vmatprep.subr.bf16.mxu0 %v189
    %436 = vmatpush1.bf16.msra.mxu0 %v188
    %437 = vmatprep.subr.bf16.mxu0 %v186
    %438 = vmatpush1.bf16.msra.mxu0 %v185
    %439 = vmatprep.subr.bf16.mxu0 %v183
    %440 = vmatpush1.bf16.msra.mxu0 %v182
    %441 = vmatprep.subr.bf16.mxu0 %v180
    %442 = vmatpush1.bf16.msra.mxu0 %v179
    %443 = vmatprep.subr.bf16.mxu0 %v177
    %444 = vmatpush1.bf16.msra.mxu0 %v176
    %445 = vmatprep.subr.bf16.mxu0 %v174
    %446 = vmatpush1.bf16.msra.mxu0 %v173
    %447 = vmatprep.subr.bf16.mxu0 %v171
    %448 = vmatpush1.bf16.msra.mxu0 %v170
    %449 = vmatprep.subr.bf16.mxu0 %v168
    %450 = vmatpush1.bf16.msra.mxu0 %v167
    %451 = vmatprep.subr.bf16.mxu0 0
    %452 = vmatpush2.bf16.msra.mxu0 0
    %453 = vmatprep.subr.bf16.mxu0 0
    %454 = vmatpush2.bf16.msra.mxu0 0
    %455 = vmatprep.subr.bf16.mxu0 0
    %456 = vmatpush2.bf16.msra.mxu0 0
    %457 = vmatprep.subr.bf16.mxu0 0
    %458 = vmatpush2.bf16.msra.mxu0 0
    %459 = vmatprep.subr.bf16.mxu0 0
    %460 = vmatpush2.bf16.msra.mxu0 0
    %461 = vmatprep.subr.bf16.mxu0 0
    %462 = vmatpush2.bf16.msra.mxu0 0
    %463 = vmatprep.subr.bf16.mxu0 0
    %464 = vmatpush2.bf16.msra.mxu0 0
    %465 = vmatprep.subr.bf16.mxu0 0
    %466 = vmatpush2.bf16.msra.mxu0 0
    %467 = vmatprep.mubr.bf16.mxu0 0
    %468 = vmatmul.mubr.bf16.gmra.mxu0 %v434
    %v469 = vpop.f32.mrf.mxu0
    %v470 = vadd.f32 0.0, %v469
    %v471 = vpop.f32.mrf.mxu0
    %v472 = vadd.f32 0.0, %v471
    %v473 = vpop.f32.mrf.mxu0
    %v474 = vpop.f32.mrf.mxu0
    %475 = vdwg.mxu0
    %476 = vmatprep.subr.bf16.mxu0 0
    %477 = vmatpush1.bf16.msra.mxu0 %v190
    %478 = vmatprep.subr.bf16.mxu0 0
    %479 = vmatpush1.bf16.msra.mxu0 %v187
    %480 = vmatprep.subr.bf16.mxu0 0
    %481 = vmatpush1.bf16.msra.mxu0 %v184
    %482 = vmatprep.subr.bf16.mxu0 0
    %483 = vmatpush1.bf16.msra.mxu0 %v181
    %484 = vmatprep.subr.bf16.mxu0 0
    %485 = vmatpush1.bf16.msra.mxu0 %v178
    %486 = vmatprep.subr.bf16.mxu0 0
    %487 = vmatpush1.bf16.msra.mxu0 %v175
    %488 = vmatprep.subr.bf16.mxu0 0
    %489 = vmatpush1.bf16.msra.mxu0 %v172
    %490 = vmatprep.subr.bf16.mxu0 0
    %491 = vmatpush1.bf16.msra.mxu0 %v169
    %492 = vmatprep.subr.bf16.mxu0 0
    %493 = vmatpush2.bf16.msra.mxu0 0
    %494 = vmatprep.subr.bf16.mxu0 0
    %495 = vmatpush2.bf16.msra.mxu0 0
    %496 = vmatprep.subr.bf16.mxu0 0
    %497 = vmatpush2.bf16.msra.mxu0 0
    %498 = vmatprep.subr.bf16.mxu0 0
    %499 = vmatpush2.bf16.msra.mxu0 0
    %500 = vmatprep.subr.bf16.mxu0 0
    %501 = vmatpush2.bf16.msra.mxu0 0
    %502 = vmatprep.subr.bf16.mxu0 0
    %503 = vmatpush2.bf16.msra.mxu0 0
    %504 = vmatprep.subr.bf16.mxu0 0
    %505 = vmatpush2.bf16.msra.mxu0 0
    %506 = vmatprep.subr.bf16.mxu0 0
    %507 = vmatpush2.bf16.msra.mxu0 0
    %508 = vmatprep.mubr.bf16.mxu0 0
    %509 = vmatmul.mubr.bf16.gmra.mxu0 %v434
    %v510 = vpop.f32.mrf.mxu0
    %v511 = vadd.f32 0.0, %v510
    %v512 = vpop.f32.mrf.mxu0
    %v513 = vpop.f32.mrf.mxu0
    %v514 = vpop.f32.mrf.mxu0
    %515 = vdwg.mxu0
    %v516 = vadd.f32 %v431, %v470
    %v517 = vxor.u32 %v516, 2147483648
    %v518 = vmul.f32 %v517, 1.442695
    %v519 = vpow.pop %v518
    %v520 = vadd.f32 %v519, 1.0
    %v521 = vrcp.pop %v520
    %v522 = vmul.f32 1.0, %v521
    %v523 = vadd.f32 %v432, %v472
    %v524 = vxor.u32 %v523, 2147483648
    %v525 = vmul.f32 %v524, 1.442695
    %v526 = vpow.pop %v525
    %v527 = vadd.f32 %v526, 1.0
    %v528 = vrcp.pop %v527
    %v529 = vmul.f32 1.0, %v528
    %v530 = vadd.f32 %v511, %v314
    %v531 = vmul.f32 %v522, %v530
    %v532 = vadd.f32 %v433, %v531
    %v533 = vtanh.pop %v532
    %v534 = vsub.f32 %v429, %v533
    %v535 = vmul.f32 %v529, %v534
    %v536 = vadd.f32 %v533, %v535
    %s537 = scalar_lea.vmem [#allocation2], 72
    %v538 = vld [vmem:[%s537] sm:$0xff]
    %v539 = vld [vmem:[%s537 + $0x8] sm:$0xff]
    %v540 = vld [vmem:[%s537 + $0x10] sm:$0xff]
    %v541 = vpack.c.bf16 %v536, %v536
    %542 = vmatprep.subr.bf16.mxu0 %v189
    %543 = vmatpush1.bf16.msra.mxu0 %v188
    %544 = vmatprep.subr.bf16.mxu0 %v186
    %545 = vmatpush1.bf16.msra.mxu0 %v185
    %546 = vmatprep.subr.bf16.mxu0 %v183
    %547 = vmatpush1.bf16.msra.mxu0 %v182
    %548 = vmatprep.subr.bf16.mxu0 %v180
    %549 = vmatpush1.bf16.msra.mxu0 %v179
    %550 = vmatprep.subr.bf16.mxu0 %v177
    %551 = vmatpush1.bf16.msra.mxu0 %v176
    %552 = vmatprep.subr.bf16.mxu0 %v174
    %553 = vmatpush1.bf16.msra.mxu0 %v173
    %554 = vmatprep.subr.bf16.mxu0 %v171
    %555 = vmatpush1.bf16.msra.mxu0 %v170
    %556 = vmatprep.subr.bf16.mxu0 %v168
    %557 = vmatpush1.bf16.msra.mxu0 %v167
    %558 = vmatprep.subr.bf16.mxu0 0
    %559 = vmatpush2.bf16.msra.mxu0 0
    %560 = vmatprep.subr.bf16.mxu0 0
    %561 = vmatpush2.bf16.msra.mxu0 0
    %562 = vmatprep.subr.bf16.mxu0 0
    %563 = vmatpush2.bf16.msra.mxu0 0
    %564 = vmatprep.subr.bf16.mxu0 0
    %565 = vmatpush2.bf16.msra.mxu0 0
    %566 = vmatprep.subr.bf16.mxu0 0
    %567 = vmatpush2.bf16.msra.mxu0 0
    %568 = vmatprep.subr.bf16.mxu0 0
    %569 = vmatpush2.bf16.msra.mxu0 0
    %570 = vmatprep.subr.bf16.mxu0 0
    %571 = vmatpush2.bf16.msra.mxu0 0
    %572 = vmatprep.subr.bf16.mxu0 0
    %573 = vmatpush2.bf16.msra.mxu0 0
    %574 = vmatprep.mubr.bf16.mxu0 0
    %575 = vmatmul.mubr.bf16.gmra.mxu0 %v541
    %v576 = vpop.f32.mrf.mxu0
    %v577 = vadd.f32 0.0, %v576
    %v578 = vpop.f32.mrf.mxu0
    %v579 = vadd.f32 0.0, %v578
    %v580 = vpop.f32.mrf.mxu0
    %v581 = vpop.f32.mrf.mxu0
    %582 = vdwg.mxu0
    %583 = vmatprep.subr.bf16.mxu0 0
    %584 = vmatpush1.bf16.msra.mxu0 %v190
    %585 = vmatprep.subr.bf16.mxu0 0
    %586 = vmatpush1.bf16.msra.mxu0 %v187
    %587 = vmatprep.subr.bf16.mxu0 0
    %588 = vmatpush1.bf16.msra.mxu0 %v184
    %589 = vmatprep.subr.bf16.mxu0 0
    %590 = vmatpush1.bf16.msra.mxu0 %v181
    %591 = vmatprep.subr.bf16.mxu0 0
    %592 = vmatpush1.bf16.msra.mxu0 %v178
    %593 = vmatprep.subr.bf16.mxu0 0
    %594 = vmatpush1.bf16.msra.mxu0 %v175
    %595 = vmatprep.subr.bf16.mxu0 0
    %596 = vmatpush1.bf16.msra.mxu0 %v172
    %597 = vmatprep.subr.bf16.mxu0 0
    %598 = vmatpush1.bf16.msra.mxu0 %v169
    %599 = vmatprep.subr.bf16.mxu0 0
    %600 = vmatpush2.bf16.msra.mxu0 0
    %601 = vmatprep.subr.bf16.mxu0 0
    %602 = vmatpush2.bf16.msra.mxu0 0
    %603 = vmatprep.subr.bf16.mxu0 0
    %604 = vmatpush2.bf16.msra.mxu0 0
    %605 = vmatprep.subr.bf16.mxu0 0
    %606 = vmatpush2.bf16.msra.mxu0 0
    %607 = vmatprep.subr.bf16.mxu0 0
    %608 = vmatpush2.bf16.msra.mxu0 0
    %609 = vmatprep.subr.bf16.mxu0 0
    %610 = vmatpush2.bf16.msra.mxu0 0
    %611 = vmatprep.subr.bf16.mxu0 0
    %612 = vmatpush2.bf16.msra.mxu0 0
    %613 = vmatprep.subr.bf16.mxu0 0
    %614 = vmatpush2.bf16.msra.mxu0 0
    %615 = vmatprep.mubr.bf16.mxu0 0
    %616 = vmatmul.mubr.bf16.gmra.mxu0 %v541
    %v617 = vpop.f32.mrf.mxu0
    %v618 = vadd.f32 0.0, %v617
    %v619 = vpop.f32.mrf.mxu0
    %v620 = vpop.f32.mrf.mxu0
    %v621 = vpop.f32.mrf.mxu0
    %622 = vdwg.mxu0
    %v623 = vadd.f32 %v538, %v577
    %v624 = vxor.u32 %v623, 2147483648
    %v625 = vmul.f32 %v624, 1.442695
    %v626 = vpow.pop %v625
    %v627 = vadd.f32 %v626, 1.0
    %v628 = vrcp.pop %v627
    %v629 = vmul.f32 1.0, %v628
    %v630 = vadd.f32 %v539, %v579
    %v631 = vxor.u32 %v630, 2147483648
    %v632 = vmul.f32 %v631, 1.442695
    %v633 = vpow.pop %v632
    %v634 = vadd.f32 %v633, 1.0
    %v635 = vrcp.pop %v634
    %v636 = vmul.f32 1.0, %v635
    %v637 = vadd.f32 %v618, %v314
    %v638 = vmul.f32 %v629, %v637
    %v639 = vadd.f32 %v540, %v638
    %v640 = vtanh.pop %v639
    %v641 = vsub.f32 %v536, %v640
    %v642 = vmul.f32 %v636, %v641
    %v643 = vadd.f32 %v640, %v642
    %s644 = scalar_lea.vmem [#allocation2], 96
    %v645 = vld [vmem:[%s644] sm:$0xff]
    %v646 = vld [vmem:[%s644 + $0x8] sm:$0xff]
    %v647 = vld [vmem:[%s644 + $0x10] sm:$0xff]
    %v648 = vpack.c.bf16 %v643, %v643
    %649 = vmatprep.subr.bf16.mxu0 %v189
    %650 = vmatpush1.bf16.msra.mxu0 %v188
    %651 = vmatprep.subr.bf16.mxu0 %v186
    %652 = vmatpush1.bf16.msra.mxu0 %v185
    %653 = vmatprep.subr.bf16.mxu0 %v183
    %654 = vmatpush1.bf16.msra.mxu0 %v182
    %655 = vmatprep.subr.bf16.mxu0 %v180
    %656 = vmatpush1.bf16.msra.mxu0 %v179
    %657 = vmatprep.subr.bf16.mxu0 %v177
    %658 = vmatpush1.bf16.msra.mxu0 %v176
    %659 = vmatprep.subr.bf16.mxu0 %v174
    %660 = vmatpush1.bf16.msra.mxu0 %v173
    %661 = vmatprep.subr.bf16.mxu0 %v171
    %662 = vmatpush1.bf16.msra.mxu0 %v170
    %663 = vmatprep.subr.bf16.mxu0 %v168
    %664 = vmatpush1.bf16.msra.mxu0 %v167
    %665 = vmatprep.subr.bf16.mxu0 0
    %666 = vmatpush2.bf16.msra.mxu0 0
    %667 = vmatprep.subr.bf16.mxu0 0
    %668 = vmatpush2.bf16.msra.mxu0 0
    %669 = vmatprep.subr.bf16.mxu0 0
    %670 = vmatpush2.bf16.msra.mxu0 0
    %671 = vmatprep.subr.bf16.mxu0 0
    %672 = vmatpush2.bf16.msra.mxu0 0
    %673 = vmatprep.subr.bf16.mxu0 0
    %674 = vmatpush2.bf16.msra.mxu0 0
    %675 = vmatprep.subr.bf16.mxu0 0
    %676 = vmatpush2.bf16.msra.mxu0 0
    %677 = vmatprep.subr.bf16.mxu0 0
    %678 = vmatpush2.bf16.msra.mxu0 0
    %679 = vmatprep.subr.bf16.mxu0 0
    %680 = vmatpush2.bf16.msra.mxu0 0
    %681 = vmatprep.mubr.bf16.mxu0 0
    %682 = vmatmul.mubr.bf16.gmra.mxu0 %v648
    %v683 = vpop.f32.mrf.mxu0
    %v684 = vadd.f32 0.0, %v683
    %v685 = vpop.f32.mrf.mxu0
    %v686 = vadd.f32 0.0, %v685
    %v687 = vpop.f32.mrf.mxu0
    %v688 = vpop.f32.mrf.mxu0
    %689 = vdwg.mxu0
    %690 = vmatprep.subr.bf16.mxu0 0
    %691 = vmatpush1.bf16.msra.mxu0 %v190
    %692 = vmatprep.subr.bf16.mxu0 0
    %693 = vmatpush1.bf16.msra.mxu0 %v187
    %694 = vmatprep.subr.bf16.mxu0 0
    %695 = vmatpush1.bf16.msra.mxu0 %v184
    %696 = vmatprep.subr.bf16.mxu0 0
    %697 = vmatpush1.bf16.msra.mxu0 %v181
    %698 = vmatprep.subr.bf16.mxu0 0
    %699 = vmatpush1.bf16.msra.mxu0 %v178
    %700 = vmatprep.subr.bf16.mxu0 0
    %701 = vmatpush1.bf16.msra.mxu0 %v175
    %702 = vmatprep.subr.bf16.mxu0 0
    %703 = vmatpush1.bf16.msra.mxu0 %v172
    %704 = vmatprep.subr.bf16.mxu0 0
    %705 = vmatpush1.bf16.msra.mxu0 %v169
    %706 = vmatprep.subr.bf16.mxu0 0
    %707 = vmatpush2.bf16.msra.mxu0 0
    %708 = vmatprep.subr.bf16.mxu0 0
    %709 = vmatpush2.bf16.msra.mxu0 0
    %710 = vmatprep.subr.bf16.mxu0 0
    %711 = vmatpush2.bf16.msra.mxu0 0
    %712 = vmatprep.subr.bf16.mxu0 0
    %713 = vmatpush2.bf16.msra.mxu0 0
    %714 = vmatprep.subr.bf16.mxu0 0
    %715 = vmatpush2.bf16.msra.mxu0 0
    %716 = vmatprep.subr.bf16.mxu0 0
    %717 = vmatpush2.bf16.msra.mxu0 0
    %718 = vmatprep.subr.bf16.mxu0 0
    %719 = vmatpush2.bf16.msra.mxu0 0
    %720 = vmatprep.subr.bf16.mxu0 0
    %721 = vmatpush2.bf16.msra.mxu0 0
    %722 = vmatprep.mubr.bf16.mxu0 0
    %723 = vmatmul.mubr.bf16.gmra.mxu0 %v648
    %v724 = vpop.f32.mrf.mxu0
    %v725 = vadd.f32 0.0, %v724
    %v726 = vpop.f32.mrf.mxu0
    %v727 = vpop.f32.mrf.mxu0
    %v728 = vpop.f32.mrf.mxu0
    %729 = vdwg.mxu0
    %v730 = vadd.f32 %v645, %v684
    %v731 = vxor.u32 %v730, 2147483648
    %v732 = vmul.f32 %v731, 1.442695
    %v733 = vpow.pop %v732
    %v734 = vadd.f32 %v733, 1.0
    %v735 = vrcp.pop %v734
    %v736 = vmul.f32 1.0, %v735
    %v737 = vadd.f32 %v646, %v686
    %v738 = vxor.u32 %v737, 2147483648
    %v739 = vmul.f32 %v738, 1.442695
    %v740 = vpow.pop %v739
    %v741 = vadd.f32 %v740, 1.0
    %v742 = vrcp.pop %v741
    %v743 = vmul.f32 1.0, %v742
    %v744 = vadd.f32 %v725, %v314
    %v745 = vmul.f32 %v736, %v744
    %v746 = vadd.f32 %v647, %v745
    %v747 = vtanh.pop %v746
    %v748 = vsub.f32 %v643, %v747
    %v749 = vmul.f32 %v743, %v748
    %v750 = vadd.f32 %v747, %v749
    %s751 = scalar_lea.vmem [#allocation2], 120
    %v752 = vld [vmem:[%s751] sm:$0xff]
    %v753 = vld [vmem:[%s751 + $0x8] sm:$0xff]
    %v754 = vld [vmem:[%s751 + $0x10] sm:$0xff]
    %v755 = vpack.c.bf16 %v750, %v750
    %756 = vmatprep.subr.bf16.mxu0 %v189
    %757 = vmatpush1.bf16.msra.mxu0 %v188
    %758 = vmatprep.subr.bf16.mxu0 %v186
    %759 = vmatpush1.bf16.msra.mxu0 %v185
    %760 = vmatprep.subr.bf16.mxu0 %v183
    %761 = vmatpush1.bf16.msra.mxu0 %v182
    %762 = vmatprep.subr.bf16.mxu0 %v180
    %763 = vmatpush1.bf16.msra.mxu0 %v179
    %764 = vmatprep.subr.bf16.mxu0 %v177
    %765 = vmatpush1.bf16.msra.mxu0 %v176
    %766 = vmatprep.subr.bf16.mxu0 %v174
    %767 = vmatpush1.bf16.msra.mxu0 %v173
    %768 = vmatprep.subr.bf16.mxu0 %v171
    %769 = vmatpush1.bf16.msra.mxu0 %v170
    %770 = vmatprep.subr.bf16.mxu0 %v168
    %771 = vmatpush1.bf16.msra.mxu0 %v167
    %772 = vmatprep.subr.bf16.mxu0 0
    %773 = vmatpush2.bf16.msra.mxu0 0
    %774 = vmatprep.subr.bf16.mxu0 0
    %775 = vmatpush2.bf16.msra.mxu0 0
    %776 = vmatprep.subr.bf16.mxu0 0
    %777 = vmatpush2.bf16.msra.mxu0 0
    %778 = vmatprep.subr.bf16.mxu0 0
    %779 = vmatpush2.bf16.msra.mxu0 0
    %780 = vmatprep.subr.bf16.mxu0 0
    %781 = vmatpush2.bf16.msra.mxu0 0
    %782 = vmatprep.subr.bf16.mxu0 0
    %783 = vmatpush2.bf16.msra.mxu0 0
    %784 = vmatprep.subr.bf16.mxu0 0
    %785 = vmatpush2.bf16.msra.mxu0 0
    %786 = vmatprep.subr.bf16.mxu0 0
    %787 = vmatpush2.bf16.msra.mxu0 0
    %788 = vmatprep.mubr.bf16.mxu0 0
    %789 = vmatmul.mubr.bf16.gmra.mxu0 %v755
    %v790 = vpop.f32.mrf.mxu0
    %v791 = vadd.f32 0.0, %v790
    %v792 = vpop.f32.mrf.mxu0
    %v793 = vadd.f32 0.0, %v792
    %v794 = vpop.f32.mrf.mxu0
    %v795 = vpop.f32.mrf.mxu0
    %796 = vdwg.mxu0
    %797 = vmatprep.subr.bf16.mxu0 0
    %798 = vmatpush1.bf16.msra.mxu0 %v190
    %799 = vmatprep.subr.bf16.mxu0 0
    %800 = vmatpush1.bf16.msra.mxu0 %v187
    %801 = vmatprep.subr.bf16.mxu0 0
    %802 = vmatpush1.bf16.msra.mxu0 %v184
    %803 = vmatprep.subr.bf16.mxu0 0
    %804 = vmatpush1.bf16.msra.mxu0 %v181
    %805 = vmatprep.subr.bf16.mxu0 0
    %806 = vmatpush1.bf16.msra.mxu0 %v178
    %807 = vmatprep.subr.bf16.mxu0 0
    %808 = vmatpush1.bf16.msra.mxu0 %v175
    %809 = vmatprep.subr.bf16.mxu0 0
    %810 = vmatpush1.bf16.msra.mxu0 %v172
    %811 = vmatprep.subr.bf16.mxu0 0
    %812 = vmatpush1.bf16.msra.mxu0 %v169
    %813 = vmatprep.subr.bf16.mxu0 0
    %814 = vmatpush2.bf16.msra.mxu0 0
    %815 = vmatprep.subr.bf16.mxu0 0
    %816 = vmatpush2.bf16.msra.mxu0 0
    %817 = vmatprep.subr.bf16.mxu0 0
    %818 = vmatpush2.bf16.msra.mxu0 0
    %819 = vmatprep.subr.bf16.mxu0 0
    %820 = vmatpush2.bf16.msra.mxu0 0
    %821 = vmatprep.subr.bf16.mxu0 0
    %822 = vmatpush2.bf16.msra.mxu0 0
    %823 = vmatprep.subr.bf16.mxu0 0
    %824 = vmatpush2.bf16.msra.mxu0 0
    %825 = vmatprep.subr.bf16.mxu0 0
    %826 = vmatpush2.bf16.msra.mxu0 0
    %827 = vmatprep.subr.bf16.mxu0 0
    %828 = vmatpush2.bf16.msra.mxu0 0
    %829 = vmatprep.mubr.bf16.mxu0 0
    %830 = vmatmul.mubr.bf16.gmra.mxu0 %v755
    %v831 = vpop.f32.mrf.mxu0
    %v832 = vadd.f32 0.0, %v831
    %v833 = vpop.f32.mrf.mxu0
    %v834 = vpop.f32.mrf.mxu0
    %v835 = vpop.f32.mrf.mxu0
    %836 = vdwg.mxu0
    %v837 = vadd.f32 %v752, %v791
    %v838 = vxor.u32 %v837, 2147483648
    %v839 = vmul.f32 %v838, 1.442695
    %v840 = vpow.pop %v839
    %v841 = vadd.f32 %v840, 1.0
    %v842 = vrcp.pop %v841
    %v843 = vmul.f32 1.0, %v842
    %v844 = vadd.f32 %v753, %v793
    %v845 = vxor.u32 %v844, 2147483648
    %v846 = vmul.f32 %v845, 1.442695
    %v847 = vpow.pop %v846
    %v848 = vadd.f32 %v847, 1.0
    %v849 = vrcp.pop %v848
    %v850 = vmul.f32 1.0, %v849
    %v851 = vadd.f32 %v832, %v314
    %v852 = vmul.f32 %v843, %v851
    %v853 = vadd.f32 %v754, %v852
    %v854 = vtanh.pop %v853
    %v855 = vsub.f32 %v750, %v854
    %v856 = vmul.f32 %v850, %v855
    %v857 = vadd.f32 %v854, %v856
    %s858 = scalar_lea.vmem [#allocation2], 144
    %v859 = vld [vmem:[%s858] sm:$0xff]
    %v860 = vld [vmem:[%s858 + $0x8] sm:$0xff]
    %v861 = vld [vmem:[%s858 + $0x10] sm:$0xff]
    %v862 = vpack.c.bf16 %v857, %v857
    %863 = vmatprep.subr.bf16.mxu0 %v189
    %864 = vmatpush1.bf16.msra.mxu0 %v188
    %865 = vmatprep.subr.bf16.mxu0 %v186
    %866 = vmatpush1.bf16.msra.mxu0 %v185
    %867 = vmatprep.subr.bf16.mxu0 %v183
    %868 = vmatpush1.bf16.msra.mxu0 %v182
    %869 = vmatprep.subr.bf16.mxu0 %v180
    %870 = vmatpush1.bf16.msra.mxu0 %v179
    %871 = vmatprep.subr.bf16.mxu0 %v177
    %872 = vmatpush1.bf16.msra.mxu0 %v176
    %873 = vmatprep.subr.bf16.mxu0 %v174
    %874 = vmatpush1.bf16.msra.mxu0 %v173
    %875 = vmatprep.subr.bf16.mxu0 %v171
    %876 = vmatpush1.bf16.msra.mxu0 %v170
    %877 = vmatprep.subr.bf16.mxu0 %v168
    %878 = vmatpush1.bf16.msra.mxu0 %v167
    %879 = vmatprep.subr.bf16.mxu0 0
    %880 = vmatpush2.bf16.msra.mxu0 0
    %881 = vmatprep.subr.bf16.mxu0 0
    %882 = vmatpush2.bf16.msra.mxu0 0
    %883 = vmatprep.subr.bf16.mxu0 0
    %884 = vmatpush2.bf16.msra.mxu0 0
    %885 = vmatprep.subr.bf16.mxu0 0
    %886 = vmatpush2.bf16.msra.mxu0 0
    %887 = vmatprep.subr.bf16.mxu0 0
    %888 = vmatpush2.bf16.msra.mxu0 0
    %889 = vmatprep.subr.bf16.mxu0 0
    %890 = vmatpush2.bf16.msra.mxu0 0
    %891 = vmatprep.subr.bf16.mxu0 0
    %892 = vmatpush2.bf16.msra.mxu0 0
    %893 = vmatprep.subr.bf16.mxu0 0
    %894 = vmatpush2.bf16.msra.mxu0 0
    %895 = vmatprep.mubr.bf16.mxu0 0
    %896 = vmatmul.mubr.bf16.gmra.mxu0 %v862
    %v897 = vpop.f32.mrf.mxu0
    %v898 = vadd.f32 0.0, %v897
    %v899 = vpop.f32.mrf.mxu0
    %v900 = vadd.f32 0.0, %v899
    %v901 = vpop.f32.mrf.mxu0
    %v902 = vpop.f32.mrf.mxu0
    %903 = vdwg.mxu0
    %904 = vmatprep.subr.bf16.mxu0 0
    %905 = vmatpush1.bf16.msra.mxu0 %v190
    %906 = vmatprep.subr.bf16.mxu0 0
    %907 = vmatpush1.bf16.msra.mxu0 %v187
    %908 = vmatprep.subr.bf16.mxu0 0
    %909 = vmatpush1.bf16.msra.mxu0 %v184
    %910 = vmatprep.subr.bf16.mxu0 0
    %911 = vmatpush1.bf16.msra.mxu0 %v181
    %912 = vmatprep.subr.bf16.mxu0 0
    %913 = vmatpush1.bf16.msra.mxu0 %v178
    %914 = vmatprep.subr.bf16.mxu0 0
    %915 = vmatpush1.bf16.msra.mxu0 %v175
    %916 = vmatprep.subr.bf16.mxu0 0
    %917 = vmatpush1.bf16.msra.mxu0 %v172
    %918 = vmatprep.subr.bf16.mxu0 0
    %919 = vmatpush1.bf16.msra.mxu0 %v169
    %920 = vmatprep.subr.bf16.mxu0 0
    %921 = vmatpush2.bf16.msra.mxu0 0
    %922 = vmatprep.subr.bf16.mxu0 0
    %923 = vmatpush2.bf16.msra.mxu0 0
    %924 = vmatprep.subr.bf16.mxu0 0
    %925 = vmatpush2.bf16.msra.mxu0 0
    %926 = vmatprep.subr.bf16.mxu0 0
    %927 = vmatpush2.bf16.msra.mxu0 0
    %928 = vmatprep.subr.bf16.mxu0 0
    %929 = vmatpush2.bf16.msra.mxu0 0
    %930 = vmatprep.subr.bf16.mxu0 0
    %931 = vmatpush2.bf16.msra.mxu0 0
    %932 = vmatprep.subr.bf16.mxu0 0
    %933 = vmatpush2.bf16.msra.mxu0 0
    %934 = vmatprep.subr.bf16.mxu0 0
    %935 = vmatpush2.bf16.msra.mxu0 0
    %936 = vmatprep.mubr.bf16.mxu0 0
    %937 = vmatmul.mubr.bf16.gmra.mxu0 %v862
    %v938 = vpop.f32.mrf.mxu0
    %v939 = vadd.f32 0.0, %v938
    %v940 = vpop.f32.mrf.mxu0
    %v941 = vpop.f32.mrf.mxu0
    %v942 = vpop.f32.mrf.mxu0
    %943 = vdwg.mxu0
    %v944 = vadd.f32 %v859, %v898
    %v945 = vxor.u32 %v944, 2147483648
    %v946 = vmul.f32 %v945, 1.442695
    %v947 = vpow.pop %v946
    %v948 = vadd.f32 %v947, 1.0
    %v949 = vrcp.pop %v948
    %v950 = vmul.f32 1.0, %v949
    %v951 = vadd.f32 %v860, %v900
    %v952 = vxor.u32 %v951, 2147483648
    %v953 = vmul.f32 %v952, 1.442695
    %v954 = vpow.pop %v953
    %v955 = vadd.f32 %v954, 1.0
    %v956 = vrcp.pop %v955
    %v957 = vmul.f32 1.0, %v956
    %v958 = vadd.f32 %v939, %v314
    %v959 = vmul.f32 %v950, %v958
    %v960 = vadd.f32 %v861, %v959
    %v961 = vtanh.pop %v960
    %v962 = vsub.f32 %v857, %v961
    %v963 = vmul.f32 %v957, %v962
    %v964 = vadd.f32 %v961, %v963
    %s965 = scalar_lea.vmem [#allocation2], 168
    %v966 = vld [vmem:[%s965] sm:$0xff]
    %v967 = vld [vmem:[%s965 + $0x8] sm:$0xff]
    %v968 = vld [vmem:[%s965 + $0x10] sm:$0xff]
    %v969 = vpack.c.bf16 %v964, %v964
    %970 = vmatprep.subr.bf16.mxu0 %v189
    %971 = vmatpush1.bf16.msra.mxu0 %v188
    %972 = vmatprep.subr.bf16.mxu0 %v186
    %973 = vmatpush1.bf16.msra.mxu0 %v185
    %974 = vmatprep.subr.bf16.mxu0 %v183
    %975 = vmatpush1.bf16.msra.mxu0 %v182
    %976 = vmatprep.subr.bf16.mxu0 %v180
    %977 = vmatpush1.bf16.msra.mxu0 %v179
    %978 = vmatprep.subr.bf16.mxu0 %v177
    %979 = vmatpush1.bf16.msra.mxu0 %v176
    %980 = vmatprep.subr.bf16.mxu0 %v174
    %981 = vmatpush1.bf16.msra.mxu0 %v173
    %982 = vmatprep.subr.bf16.mxu0 %v171
    %983 = vmatpush1.bf16.msra.mxu0 %v170
    %984 = vmatprep.subr.bf16.mxu0 %v168
    %985 = vmatpush1.bf16.msra.mxu0 %v167
    %986 = vmatprep.subr.bf16.mxu0 0
    %987 = vmatpush2.bf16.msra.mxu0 0
    %988 = vmatprep.subr.bf16.mxu0 0
    %989 = vmatpush2.bf16.msra.mxu0 0
    %990 = vmatprep.subr.bf16.mxu0 0
    %991 = vmatpush2.bf16.msra.mxu0 0
    %992 = vmatprep.subr.bf16.mxu0 0
    %993 = vmatpush2.bf16.msra.mxu0 0
    %994 = vmatprep.subr.bf16.mxu0 0
    %995 = vmatpush2.bf16.msra.mxu0 0
    %996 = vmatprep.subr.bf16.mxu0 0
    %997 = vmatpush2.bf16.msra.mxu0 0
    %998 = vmatprep.subr.bf16.mxu0 0
    %999 = vmatpush2.bf16.msra.mxu0 0
    %1000 = vmatprep.subr.bf16.mxu0 0
    %1001 = vmatpush2.bf16.msra.mxu0 0
    %1002 = vmatprep.mubr.bf16.mxu0 0
    %1003 = vmatmul.mubr.bf16.gmra.mxu0 %v969
    %v1004 = vpop.f32.mrf.mxu0
    %v1005 = vadd.f32 0.0, %v1004
    %v1006 = vpop.f32.mrf.mxu0
    %v1007 = vadd.f32 0.0, %v1006
    %v1008 = vpop.f32.mrf.mxu0
    %v1009 = vpop.f32.mrf.mxu0
    %1010 = vdwg.mxu0
    %1011 = vmatprep.subr.bf16.mxu0 0
    %1012 = vmatpush1.bf16.msra.mxu0 %v190
    %1013 = vmatprep.subr.bf16.mxu0 0
    %1014 = vmatpush1.bf16.msra.mxu0 %v187
    %1015 = vmatprep.subr.bf16.mxu0 0
    %1016 = vmatpush1.bf16.msra.mxu0 %v184
    %1017 = vmatprep.subr.bf16.mxu0 0
    %1018 = vmatpush1.bf16.msra.mxu0 %v181
    %1019 = vmatprep.subr.bf16.mxu0 0
    %1020 = vmatpush1.bf16.msra.mxu0 %v178
    %1021 = vmatprep.subr.bf16.mxu0 0
    %1022 = vmatpush1.bf16.msra.mxu0 %v175
    %1023 = vmatprep.subr.bf16.mxu0 0
    %1024 = vmatpush1.bf16.msra.mxu0 %v172
    %1025 = vmatprep.subr.bf16.mxu0 0
    %1026 = vmatpush1.bf16.msra.mxu0 %v169
    %1027 = vmatprep.subr.bf16.mxu0 0
    %1028 = vmatpush2.bf16.msra.mxu0 0
    %1029 = vmatprep.subr.bf16.mxu0 0
    %1030 = vmatpush2.bf16.msra.mxu0 0
    %1031 = vmatprep.subr.bf16.mxu0 0
    %1032 = vmatpush2.bf16.msra.mxu0 0
    %1033 = vmatprep.subr.bf16.mxu0 0
    %1034 = vmatpush2.bf16.msra.mxu0 0
    %1035 = vmatprep.subr.bf16.mxu0 0
    %1036 = vmatpush2.bf16.msra.mxu0 0
    %1037 = vmatprep.subr.bf16.mxu0 0
    %1038 = vmatpush2.bf16.msra.mxu0 0
    %1039 = vmatprep.subr.bf16.mxu0 0
    %1040 = vmatpush2.bf16.msra.mxu0 0
    %1041 = vmatprep.subr.bf16.mxu0 0
    %1042 = vmatpush2.bf16.msra.mxu0 0
    %1043 = vmatprep.mubr.bf16.mxu0 0
    %1044 = vmatmul.mubr.bf16.gmra.mxu0 %v969
    %v1045 = vpop.f32.mrf.mxu0
    %v1046 = vadd.f32 0.0, %v1045
    %v1047 = vpop.f32.mrf.mxu0
    %v1048 = vpop.f32.mrf.mxu0
    %v1049 = vpop.f32.mrf.mxu0
    %1050 = vdwg.mxu0
    %v1051 = vadd.f32 %v966, %v1005
    %v1052 = vxor.u32 %v1051, 2147483648
    %v1053 = vmul.f32 %v1052, 1.442695
    %v1054 = vpow.pop %v1053
    %v1055 = vadd.f32 %v1054, 1.0
    %v1056 = vrcp.pop %v1055
    %v1057 = vmul.f32 1.0, %v1056
    %v1058 = vadd.f32 %v967, %v1007
    %v1059 = vxor.u32 %v1058, 2147483648
    %v1060 = vmul.f32 %v1059, 1.442695
    %v1061 = vpow.pop %v1060
    %v1062 = vadd.f32 %v1061, 1.0
    %v1063 = vrcp.pop %v1062
    %v1064 = vmul.f32 1.0, %v1063
    %v1065 = vadd.f32 %v1046, %v314
    %v1066 = vmul.f32 %v1057, %v1065
    %v1067 = vadd.f32 %v968, %v1066
    %v1068 = vtanh.pop %v1067
    %v1069 = vsub.f32 %v964, %v1068
    %v1070 = vmul.f32 %v1064, %v1069
    %v1071 = vadd.f32 %v1068, %v1070
    %1072 = vst [vmem:[#allocation7] sm:$0xff] %v1071
    // Predicated region
    $region26: #{tpu_custom_call.1} parent=1 // pred_check
      _
    $region27: #{tpu_custom_call.1} parent=1 // pred_check_branch
      %1074 = sbr.rel (0) target = $region29
    $region28: #{tpu_custom_call.1} parent=1 // pred_region
      %s1076 = ssub.s32 128, 128
      %1077 = vsyncadd [#allocation4], %s1076
      %s1079 = sshll.u32 [#allocation7], 4
      %s1080 = int_to_ptr.vmem [resolvable:$true] %s1079
      %1082 = dma.vmem_to_hbm [thread:$0]  %s1080, 128, %s3, [#allocation4]
    $region29: #{tpu_custom_call.1} parent=1 // pred_fallthru
      _
    // Predicated region
    $region30: #{tpu_custom_call.1} parent=1 // pred_check
      _
    $region31: #{tpu_custom_call.1} parent=1 // pred_check_branch
      %1084 = sbr.rel (0) target = $region33
    $region32: #{tpu_custom_call.1} parent=1 // pred_region
      %1085 = dma.done [#allocation4], 128
    $region33: #{tpu_custom_call.1} parent=1 // pred_fallthru
      _
    %1086 = vsyncpa [#allocation3], 1
    %1087 = vsyncpa [#allocation6], 1
    %1088 = vsyncpa [#allocation4], 1

</llo_original>
